<compile_context>
chip_gen: v7x
topology: tpu7x:2x2x1
jax: 0.10.0
libtpu: 0.0.40
codegen_flags: <defaults>
</compile_context>

<pallas_src>
import math

import jax
import jax.numpy as jnp
from jax.experimental import pallas as pl
from jax.experimental.pallas import tpu as pltpu

# ---------------- model hyper-parameters (small, DeBERTa-style) -------------
BATCH = 2
SEQ = 8
HIDDEN = 32
NUM_HEADS = 4
HEAD_DIM = HIDDEN // NUM_HEADS
INTERMEDIATE = 64
NUM_LAYERS = 2
VOCAB = 100
MAX_POS = 16
TYPE_VOCAB = 2
LN_EPS = 1e-7  # DeBERTa layer_norm_eps

WEIGHT_DTYPE = jnp.bfloat16  # MXU operand / weight-DMA dtype (accumulate in f32)


# ------------------------------ fused kernel --------------------------------
def _encoder_kernel(
    emb_ref,       # [B*S, H]   f32   word + pos + type embeddings
    mask_ref,      # [B*S, B*S] f32   combined additive attn mask (0 / -1e9)
    msk_mul_ref,   # [B*S, 1]   f32   multiplicative pad mask (1 / 0)
    emb_g_ref,     # [1, H]
    emb_b_ref,     # [1, H]
    wqkv_ref,      # [1, H, 3H] bf16  (this layer's block)
    bqkv_ref,      # [1, 1, 3H] f32
    wo_ref,        # [1, H, H]  bf16
    bo_ref,        # [1, 1, H]  f32
    ln1_g_ref,     # [1, 1, H]
    ln1_b_ref,     # [1, 1, H]
    wi_ref,        # [1, H, I]  bf16
    bi_ref,        # [1, 1, I]  f32
    wo2_ref,       # [1, I, H]  bf16
    bo2_ref,       # [1, 1, H]  f32
    ln2_g_ref,     # [1, 1, H]
    ln2_b_ref,     # [1, 1, H]
    out_ref,       # [B, H]     f32   CLS rows only
    h_scr,         # VMEM [B*S, H] f32  hidden state carried across layers
):
    bs = BATCH * SEQ
    li = pl.program_id(0)

    def layernorm(x, g, b):
        mean = jnp.mean(x, axis=-1, keepdims=True)
        cent = x - mean
        var = jnp.mean(cent * cent, axis=-1, keepdims=True)
        return cent * jax.lax.rsqrt(var + LN_EPS) * g + b

    def gelu(x):
        # tanh-approx GELU: transcendental goes through the EUP slot (free-ish
        # on v5e); tiny numeric difference vs torch exact-erf GELU.
        c = math.sqrt(2.0 / math.pi)
        return 0.5 * x * (1.0 + jnp.tanh(c * (x + 0.044715 * x * x * x)))

    # --- first grid step: embedding LayerNorm, zero padded positions ---
    @pl.when(li == 0)
    def _():
        h0 = layernorm(emb_ref[...].astype(jnp.float32),
                       emb_g_ref[...], emb_b_ref[...])
        h_scr[...] = h0 * msk_mul_ref[...]

    h = h_scr[...]
    attn_mask = mask_ref[...]                    # precomputed on host
    scale = 1.0 / math.sqrt(HEAD_DIM)

    # ---- fused QKV projection: one [B*S, H] x [H, 3H] matmul ----
    qkv = jnp.dot(
        h.astype(WEIGHT_DTYPE), wqkv_ref[0],
        preferred_element_type=jnp.float32,
    ) + bqkv_ref[0]
    q = qkv[:, :HIDDEN] * scale                  # fold 1/sqrt(d) into q once
    k = qkv[:, HIDDEN:2 * HIDDEN]
    v = qkv[:, 2 * HIDDEN:]

    # ---- per-head attention with output projection fused into the loop ----
    # Lane slices only (no dH-minor reshape); each head's context immediately
    # hits its [dH, H] slice of the output projection (no concat / relayout).
    # TODO(synk): at real S, replace the dense [B*S, B*S] masked scores with a
    # per-(batch, q-block) flash-style grid + online softmax.
    wo = wo_ref[0]                               # [H, H] bf16
    attn_out = jnp.zeros((bs, HIDDEN), jnp.float32)
    for hd in range(NUM_HEADS):
        sl = slice(hd * HEAD_DIM, (hd + 1) * HEAD_DIM)
        qh, kh, vh = q[:, sl], k[:, sl], v[:, sl]
        s = jax.lax.dot_general(                 # contract last dims; no k.T
            qh, kh, (((1,), (1,)), ((), ())),
            preferred_element_type=jnp.float32,
        )
        s = s + attn_mask
        s = s - jnp.max(s, axis=-1, keepdims=True)
        p = jnp.exp(s)
        p = p * pl.reciprocal(jnp.sum(p, axis=-1, keepdims=True), approx=True)
        ctx_h = jnp.dot(p, vh, preferred_element_type=jnp.float32)   # [bs, dH]
        attn_out = attn_out + jnp.dot(
            ctx_h.astype(WEIGHT_DTYPE), wo[sl, :],
            preferred_element_type=jnp.float32,
        )
    attn_out = attn_out + bo_ref[0]

    # ---- add & norm ----
    h = layernorm(attn_out + h, ln1_g_ref[0], ln1_b_ref[0])

    # ---- FFN (GELU) + add & norm ----
    inter = jnp.dot(
        h.astype(WEIGHT_DTYPE), wi_ref[0],
        preferred_element_type=jnp.float32,
    ) + bi_ref[0]
    inter = gelu(inter)
    ffn = jnp.dot(
        inter.astype(WEIGHT_DTYPE), wo2_ref[0],
        preferred_element_type=jnp.float32,
    ) + bo2_ref[0]
    h = layernorm(ffn + h, ln2_g_ref[0], ln2_b_ref[0])

    h_scr[...] = h

    # ---- last layer: emit only the CLS rows ----
    @pl.when(li == pl.num_programs(0) - 1)
    def _():
        for b in range(BATCH):
            out_ref[b:b + 1, :] = h[b * SEQ:b * SEQ + 1, :].astype(out_ref.dtype)


# ------------------------- parameter initialization -------------------------
def init_params(key):
    std = 0.02
    keys = jax.random.split(key, 4 + NUM_LAYERS)
    params = {
        "word_emb": std * jax.random.normal(keys[0], (VOCAB, HIDDEN), jnp.float32),
        "pos_emb": std * jax.random.normal(keys[1], (MAX_POS, HIDDEN), jnp.float32),
        "type_emb": std * jax.random.normal(keys[2], (TYPE_VOCAB, HIDDEN), jnp.float32),
        "emb_ln_g": jnp.ones((1, HIDDEN), jnp.float32),
        "emb_ln_b": jnp.zeros((1, HIDDEN), jnp.float32),
    }

    wqkv, wo, wi, wo2 = [], [], [], []
    for li in range(NUM_LAYERS):
        lk = jax.random.split(keys[4 + li], 6)
        wq = std * jax.random.normal(lk[0], (HIDDEN, HIDDEN), jnp.float32)
        wk = std * jax.random.normal(lk[1], (HIDDEN, HIDDEN), jnp.float32)
        wv = std * jax.random.normal(lk[2], (HIDDEN, HIDDEN), jnp.float32)
        wqkv.append(jnp.concatenate([wq, wk, wv], axis=1))      # fused QKV weight
        wo.append(std * jax.random.normal(lk[3], (HIDDEN, HIDDEN), jnp.float32))
        wi.append(std * jax.random.normal(lk[4], (HIDDEN, INTERMEDIATE), jnp.float32))
        wo2.append(std * jax.random.normal(lk[5], (INTERMEDIATE, HIDDEN), jnp.float32))

    # Per-layer vectors are stored as [L, 1, D] so their per-layer BlockSpecs
    # (1, 1, D) satisfy the "last two dims equal full array dims" rule.
    params.update(
        wqkv=jnp.stack(wqkv).astype(WEIGHT_DTYPE),                       # [L, H, 3H]
        bqkv=jnp.zeros((NUM_LAYERS, 1, 3 * HIDDEN), jnp.float32),
        wo=jnp.stack(wo).astype(WEIGHT_DTYPE),                           # [L, H, H]
        bo=jnp.zeros((NUM_LAYERS, 1, HIDDEN), jnp.float32),
        ln1_g=jnp.ones((NUM_LAYERS, 1, HIDDEN), jnp.float32),
        ln1_b=jnp.zeros((NUM_LAYERS, 1, HIDDEN), jnp.float32),
        wi=jnp.stack(wi).astype(WEIGHT_DTYPE),                           # [L, H, I]
        bi=jnp.zeros((NUM_LAYERS, 1, INTERMEDIATE), jnp.float32),
        wo2=jnp.stack(wo2).astype(WEIGHT_DTYPE),                         # [L, I, H]
        bo2=jnp.zeros((NUM_LAYERS, 1, HIDDEN), jnp.float32),
        ln2_g=jnp.ones((NUM_LAYERS, 1, HIDDEN), jnp.float32),
        ln2_b=jnp.zeros((NUM_LAYERS, 1, HIDDEN), jnp.float32),
    )
    return params


# ------------------------------ forward pass ---------------------------------
def deberta_base_encoder(params, x, mask=None, segment=None):
    """Returns CLS feature [B, HIDDEN] (param.cls == 1 path of the module)."""
    B, S = x.shape
    bs = B * S
    if mask is None:
        mask = jnp.ones((B, S), jnp.float32)
    if segment is None:
        segment = jnp.zeros((B, S), jnp.int32)

    # --- embeddings (gather = glue, stays in plain JAX) ---
    emb = (
        jnp.take(params["word_emb"], x, axis=0)
        + params["pos_emb"][None, :S, :]
        + jnp.take(params["type_emb"], segment, axis=0)
    ).reshape(bs, HIDDEN)

    # --- masks precomputed on host: combined additive (block-diagonal across
    #     batches + key padding) and multiplicative pad mask ---
    mask_f = mask.astype(jnp.float32)
    row_batch = jnp.arange(bs, dtype=jnp.int32) // S
    attn_mask = jnp.where(row_batch[:, None] == row_batch[None, :], 0.0, -1e9)
    attn_mask = attn_mask + ((1.0 - mask_f) * -1e9).reshape(1, bs)   # [bs, bs]
    msk_mul = mask_f.reshape(bs, 1)                                  # [bs, 1]

    full2d = lambda shape: pl.BlockSpec(shape, lambda l: (0, 0))
    per_layer = lambda shape: pl.BlockSpec(shape, lambda l: (l, 0, 0))

    grid_spec = pltpu.PrefetchScalarGridSpec(
        num_scalar_prefetch=0,
        grid=(NUM_LAYERS,),
        in_specs=[
            full2d((bs, HIDDEN)),                        # emb
            full2d((bs, bs)),                            # attn_mask
            full2d((bs, 1)),                             # msk_mul
            full2d((1, HIDDEN)),                         # emb_ln_g
            full2d((1, HIDDEN)),                         # emb_ln_b
            per_layer((1, HIDDEN, 3 * HIDDEN)),          # wqkv
            per_layer((1, 1, 3 * HIDDEN)),               # bqkv
            per_layer((1, HIDDEN, HIDDEN)),              # wo
            per_layer((1, 1, HIDDEN)),                   # bo
            per_layer((1, 1, HIDDEN)),                   # ln1_g
            per_layer((1, 1, HIDDEN)),                   # ln1_b
            per_layer((1, HIDDEN, INTERMEDIATE)),        # wi
            per_layer((1, 1, INTERMEDIATE)),             # bi
            per_layer((1, INTERMEDIATE, HIDDEN)),        # wo2
            per_layer((1, 1, HIDDEN)),                   # bo2
            per_layer((1, 1, HIDDEN)),                   # ln2_g
            per_layer((1, 1, HIDDEN)),                   # ln2_b
        ],
        out_specs=pl.BlockSpec((B, HIDDEN), lambda l: (0, 0)),
        scratch_shapes=[pltpu.VMEM((bs, HIDDEN), jnp.float32)],
    )

    # Layer axis is a carried sequential dependence -> "arbitrary".
    # (A leading "parallel" row-block axis for v7x's two TensorCores and an
    #  explicit vmem_limit_bytes only pay off at real DeBERTa-base sizes.)
    cls_feat = pl.pallas_call(
        _encoder_kernel,
        out_shape=jax.ShapeDtypeStruct((B, HIDDEN), jnp.float32),
        grid_spec=grid_spec,
        compiler_params=pltpu.CompilerParams(dimension_semantics=("arbitrary",)),
    )(
        emb, attn_mask, msk_mul,
        params["emb_ln_g"], params["emb_ln_b"],
        params["wqkv"], params["bqkv"],
        params["wo"], params["bo"],
        params["ln1_g"], params["ln1_b"],
        params["wi"], params["bi"],
        params["wo2"], params["bo2"],
        params["ln2_g"], params["ln2_b"],
    )
    return cls_feat  # [B, HIDDEN] == last_hidden_state[:, 0, :]


# ----------------------------------- main ------------------------------------
if __name__ == "__main__":
    key = jax.random.PRNGKey(0)
    k_param, k_tok = jax.random.split(key, 2)

    params = init_params(k_param)

    # deterministic example inputs
    x = jax.random.randint(k_tok, (BATCH, SEQ), minval=4, maxval=VOCAB, dtype=jnp.int32)
    x = x.at[:, 0].set(2)  # SOS / CLS token id
    mask = jnp.ones((BATCH, SEQ), jnp.float32).at[1, SEQ - 2:].set(0.0)  # some padding
    segment = jnp.zeros((BATCH, SEQ), jnp.int32)

    feat = deberta_base_encoder(params, x, mask, segment)
    feat = jax.block_until_ready(feat)

    assert feat.shape == (BATCH, HIDDEN)
    assert jnp.all(jnp.isfinite(feat))
    print("KERNEL_OK")
</pallas_src>

<mosaic_0001>
module attributes {stable_mosaic.version = 11 : i64} {
  func.func @_encoder_kernel(%arg0: i32, %arg1: memref<16x32xf32, #tpu.memory_space<vmem>>, %arg2: memref<16x16xf32, #tpu.memory_space<vmem>>, %arg3: memref<16x1xf32, #tpu.memory_space<vmem>>, %arg4: memref<1x32xf32, #tpu.memory_space<vmem>>, %arg5: memref<1x32xf32, #tpu.memory_space<vmem>>, %arg6: memref<1x32x96xbf16, #tpu.memory_space<vmem>>, %arg7: memref<1x1x96xf32, #tpu.memory_space<vmem>>, %arg8: memref<1x32x32xbf16, #tpu.memory_space<vmem>>, %arg9: memref<1x1x32xf32, #tpu.memory_space<vmem>>, %arg10: memref<1x1x32xf32, #tpu.memory_space<vmem>>, %arg11: memref<1x1x32xf32, #tpu.memory_space<vmem>>, %arg12: memref<1x32x64xbf16, #tpu.memory_space<vmem>>, %arg13: memref<1x1x64xf32, #tpu.memory_space<vmem>>, %arg14: memref<1x64x32xbf16, #tpu.memory_space<vmem>>, %arg15: memref<1x1x32xf32, #tpu.memory_space<vmem>>, %arg16: memref<1x1x32xf32, #tpu.memory_space<vmem>>, %arg17: memref<1x1x32xf32, #tpu.memory_space<vmem>>, %arg18: memref<2x32xf32, #tpu.memory_space<vmem>>, %arg19: memref<16x32xf32, #tpu.memory_space<vmem>>) attributes {dimension_semantics = [#tpu.dimension_semantics<arbitrary>], iteration_bounds = array<i64: 2>, scalar_prefetch = 0 : i64, scratch_operands = 1 : i64, tpu.core_type = #tpu.core_type<tc>, window_params = [{pipeline_mode = #tpu.pipeline_mode<synchronous>, transform_indices = @transform_0, window_bounds = array<i64: 16, 32>}, {pipeline_mode = #tpu.pipeline_mode<synchronous>, transform_indices = @transform_1, window_bounds = array<i64: 16, 16>}, {pipeline_mode = #tpu.pipeline_mode<synchronous>, transform_indices = @transform_2, window_bounds = array<i64: 16, 1>}, {pipeline_mode = #tpu.pipeline_mode<synchronous>, transform_indices = @transform_3, window_bounds = array<i64: 1, 32>}, {pipeline_mode = #tpu.pipeline_mode<synchronous>, transform_indices = @transform_4, window_bounds = array<i64: 1, 32>}, {transform_indices = @transform_5, window_bounds = array<i64: 1, 32, 96>}, {transform_indices = @transform_6, window_bounds = array<i64: 1, 1, 96>}, {transform_indices = @transform_7, window_bounds = array<i64: 1, 32, 32>}, {transform_indices = @transform_8, window_bounds = array<i64: 1, 1, 32>}, {transform_indices = @transform_9, window_bounds = array<i64: 1, 1, 32>}, {transform_indices = @transform_10, window_bounds = array<i64: 1, 1, 32>}, {transform_indices = @transform_11, window_bounds = array<i64: 1, 32, 64>}, {transform_indices = @transform_12, window_bounds = array<i64: 1, 1, 64>}, {transform_indices = @transform_13, window_bounds = array<i64: 1, 64, 32>}, {transform_indices = @transform_14, window_bounds = array<i64: 1, 1, 32>}, {transform_indices = @transform_15, window_bounds = array<i64: 1, 1, 32>}, {transform_indices = @transform_16, window_bounds = array<i64: 1, 1, 32>}, {pipeline_mode = #tpu.pipeline_mode<synchronous>, transform_indices = @transform_17, window_bounds = array<i64: 2, 32>}]} {
    %c0_i32 = arith.constant 0 : i32
    %0 = arith.cmpi eq, %arg0, %c0_i32 : i32
    %1 = arith.extui %0 : i1 to i32
    %c0_i32_0 = arith.constant 0 : i32
    %2 = arith.cmpi ne, %1, %c0_i32_0 : i32
    scf.if %2 {
      %c0_81 = arith.constant 0 : index
      %c0_82 = arith.constant 0 : index
      %188 = vector.load %arg1[%c0_81, %c0_82] : memref<16x32xf32, #tpu.memory_space<vmem>>, vector<16x32xf32>
      %c0_83 = arith.constant 0 : index
      %c0_84 = arith.constant 0 : index
      %189 = vector.load %arg4[%c0_83, %c0_84] : memref<1x32xf32, #tpu.memory_space<vmem>>, vector<1x32xf32>
      %c0_85 = arith.constant 0 : index
      %c0_86 = arith.constant 0 : index
      %190 = vector.load %arg5[%c0_85, %c0_86] : memref<1x32xf32, #tpu.memory_space<vmem>>, vector<1x32xf32>
      %cst_87 = arith.constant dense<0.000000e+00> : vector<16xf32>
      %191 = vector.multi_reduction <add>, %188, %cst_87 [1] : vector<16x32xf32> to vector<16xf32>
      %192 = vector.shape_cast %191 : vector<16xf32> to vector<16x1xf32>
      %cst_88 = arith.constant 3.200000e+01 : f32
      %193 = vector.broadcast %cst_88 : f32 to vector<16x1xf32>
      %194 = arith.divf %192, %193 : vector<16x1xf32>
      %195 = vector.broadcast %194 : vector<16x1xf32> to vector<16x32xf32>
      %196 = arith.subf %188, %195 : vector<16x32xf32>
      %197 = arith.mulf %196, %196 : vector<16x32xf32>
      %cst_89 = arith.constant dense<0.000000e+00> : vector<16xf32>
      %198 = vector.multi_reduction <add>, %197, %cst_89 [1] : vector<16x32xf32> to vector<16xf32>
      %199 = vector.shape_cast %198 : vector<16xf32> to vector<16x1xf32>
      %cst_90 = arith.constant 3.200000e+01 : f32
      %200 = vector.broadcast %cst_90 : f32 to vector<16x1xf32>
      %201 = arith.divf %199, %200 : vector<16x1xf32>
      %cst_91 = arith.constant 1.000000e-07 : f32
      %202 = vector.broadcast %cst_91 : f32 to vector<16x1xf32>
      %203 = arith.addf %201, %202 : vector<16x1xf32>
      %204 = math.rsqrt %203 : vector<16x1xf32>
      %205 = vector.broadcast %204 : vector<16x1xf32> to vector<16x32xf32>
      %206 = arith.mulf %196, %205 : vector<16x32xf32>
      %207 = vector.broadcast %189 : vector<1x32xf32> to vector<16x32xf32>
      %208 = arith.mulf %206, %207 : vector<16x32xf32>
      %209 = vector.broadcast %190 : vector<1x32xf32> to vector<16x32xf32>
      %210 = arith.addf %208, %209 : vector<16x32xf32>
      %c0_92 = arith.constant 0 : index
      %c0_93 = arith.constant 0 : index
      %211 = vector.load %arg3[%c0_92, %c0_93] : memref<16x1xf32, #tpu.memory_space<vmem>>, vector<16x1xf32>
      %212 = vector.broadcast %211 : vector<16x1xf32> to vector<16x32xf32>
      %213 = arith.mulf %210, %212 : vector<16x32xf32>
      %c0_94 = arith.constant 0 : index
      %c0_95 = arith.constant 0 : index
      %214 = vector.load %arg19[%c0_94, %c0_95] : memref<16x32xf32, #tpu.memory_space<vmem>>, vector<16x32xf32>
      tpu.vector_store %arg19[%c0_94, %c0_95], %213 {strides = array<i32>} : memref<16x32xf32, #tpu.memory_space<vmem>>, vector<16x32xf32>,
    } else {
    }
    %c0 = arith.constant 0 : index
    %c0_1 = arith.constant 0 : index
    %3 = vector.load %arg19[%c0, %c0_1] : memref<16x32xf32, #tpu.memory_space<vmem>>, vector<16x32xf32>
    %c0_2 = arith.constant 0 : index
    %c0_3 = arith.constant 0 : index
    %4 = vector.load %arg2[%c0_2, %c0_3] : memref<16x16xf32, #tpu.memory_space<vmem>>, vector<16x16xf32>
    %5 = arith.truncf %3 : vector<16x32xf32> to vector<16x32xbf16>
    %c0_4 = arith.constant 0 : index
    %c0_5 = arith.constant 0 : index
    %c0_6 = arith.constant 0 : index
    %6 = vector.load %arg6[%c0_4, %c0_5, %c0_6] : memref<1x32x96xbf16, #tpu.memory_space<vmem>>, vector<1x32x96xbf16>
    %7 = vector.shape_cast %6 : vector<1x32x96xbf16> to vector<32x96xbf16>
    %cst = arith.constant dense<0.000000e+00> : vector<16x96xf32>
    %8 = tpu.matmul %5, %7, %cst {dimension_numbers = #tpu.dot_dimension_numbers<[1], [0], [0], [1], [0, 0, 1, 1], [], []>} : vector<16x32xbf16>, vector<32x96xbf16>, vector<16x96xf32> -> vector<16x96xf32>
    %c0_7 = arith.constant 0 : index
    %c0_8 = arith.constant 0 : index
    %c0_9 = arith.constant 0 : index
    %9 = vector.load %arg7[%c0_7, %c0_8, %c0_9] : memref<1x1x96xf32, #tpu.memory_space<vmem>>, vector<1x1x96xf32>
    %10 = vector.shape_cast %9 : vector<1x1x96xf32> to vector<1x96xf32>
    %11 = vector.broadcast %10 : vector<1x96xf32> to vector<16x96xf32>
    %12 = arith.addf %8, %11 : vector<16x96xf32>
    %13 = vector.extract_strided_slice %12 {offsets = [0, 0], sizes = [16, 32], strides = [1, 1]} : vector<16x96xf32> to vector<16x32xf32>
    %cst_10 = arith.constant 0.353553385 : f32
    %14 = vector.broadcast %cst_10 : f32 to vector<16x32xf32>
    %15 = arith.mulf %13, %14 : vector<16x32xf32>
    %16 = vector.extract_strided_slice %12 {offsets = [0, 32], sizes = [16, 32], strides = [1, 1]} : vector<16x96xf32> to vector<16x32xf32>
    %17 = vector.extract_strided_slice %12 {offsets = [0, 64], sizes = [16, 32], strides = [1, 1]} : vector<16x96xf32> to vector<16x32xf32>
    %c0_11 = arith.constant 0 : index
    %c0_12 = arith.constant 0 : index
    %c0_13 = arith.constant 0 : index
    %18 = vector.load %arg8[%c0_11, %c0_12, %c0_13] : memref<1x32x32xbf16, #tpu.memory_space<vmem>>, vector<1x32x32xbf16>
    %19 = vector.shape_cast %18 : vector<1x32x32xbf16> to vector<32x32xbf16>
    %cst_14 = arith.constant 0.000000e+00 : f32
    %20 = vector.broadcast %cst_14 : f32 to vector<16x32xf32>
    %21 = vector.extract_strided_slice %15 {offsets = [0, 0], sizes = [16, 8], strides = [1, 1]} : vector<16x32xf32> to vector<16x8xf32>
    %22 = vector.extract_strided_slice %16 {offsets = [0, 0], sizes = [16, 8], strides = [1, 1]} : vector<16x32xf32> to vector<16x8xf32>
    %23 = vector.extract_strided_slice %17 {offsets = [0, 0], sizes = [16, 8], strides = [1, 1]} : vector<16x32xf32> to vector<16x8xf32>
    %cst_15 = arith.constant dense<0.000000e+00> : vector<16x16xf32>
    %24 = tpu.matmul %21, %22, %cst_15 {dimension_numbers = #tpu.dot_dimension_numbers<[1], [1], [0], [0], [0, 0, 1, 0], [], []>} : vector<16x8xf32>, vector<16x8xf32>, vector<16x16xf32> -> vector<16x16xf32>
    %25 = arith.addf %24, %4 : vector<16x16xf32>
    %cst_16 = arith.constant dense<0xFF800000> : vector<16xf32>
    %26 = vector.multi_reduction <maximumf>, %25, %cst_16 [1] : vector<16x16xf32> to vector<16xf32>
    %27 = vector.shape_cast %26 : vector<16xf32> to vector<16x1xf32>
    %28 = vector.broadcast %27 : vector<16x1xf32> to vector<16x16xf32>
    %29 = arith.subf %25, %28 : vector<16x16xf32>
    %30 = math.exp %29 : vector<16x16xf32>
    %cst_17 = arith.constant dense<0.000000e+00> : vector<16xf32>
    %31 = vector.multi_reduction <add>, %30, %cst_17 [1] : vector<16x16xf32> to vector<16xf32>
    %32 = vector.shape_cast %31 : vector<16xf32> to vector<16x1xf32>
    %33 = tpu.reciprocal %32 {approx = true} : vector<16x1xf32> -> vector<16x1xf32>
    %34 = vector.broadcast %33 : vector<16x1xf32> to vector<16x16xf32>
    %35 = arith.mulf %30, %34 : vector<16x16xf32>
    %cst_18 = arith.constant dense<0.000000e+00> : vector<16x8xf32>
    %36 = tpu.matmul %35, %23, %cst_18 {dimension_numbers = #tpu.dot_dimension_numbers<[1], [0], [0], [1], [0, 0, 1, 1], [], []>} : vector<16x16xf32>, vector<16x8xf32>, vector<16x8xf32> -> vector<16x8xf32>
    %37 = arith.truncf %36 : vector<16x8xf32> to vector<16x8xbf16>
    %38 = vector.extract_strided_slice %19 {offsets = [0, 0], sizes = [8, 32], strides = [1, 1]} : vector<32x32xbf16> to vector<8x32xbf16>
    %cst_19 = arith.constant dense<0.000000e+00> : vector<16x32xf32>
    %39 = tpu.matmul %37, %38, %cst_19 {dimension_numbers = #tpu.dot_dimension_numbers<[1], [0], [0], [1], [0, 0, 1, 1], [], []>} : vector<16x8xbf16>, vector<8x32xbf16>, vector<16x32xf32> -> vector<16x32xf32>
    %40 = arith.addf %20, %39 : vector<16x32xf32>
    %41 = vector.extract_strided_slice %15 {offsets = [0, 8], sizes = [16, 8], strides = [1, 1]} : vector<16x32xf32> to vector<16x8xf32>
    %42 = vector.extract_strided_slice %16 {offsets = [0, 8], sizes = [16, 8], strides = [1, 1]} : vector<16x32xf32> to vector<16x8xf32>
    %43 = vector.extract_strided_slice %17 {offsets = [0, 8], sizes = [16, 8], strides = [1, 1]} : vector<16x32xf32> to vector<16x8xf32>
    %cst_20 = arith.constant dense<0.000000e+00> : vector<16x16xf32>
    %44 = tpu.matmul %41, %42, %cst_20 {dimension_numbers = #tpu.dot_dimension_numbers<[1], [1], [0], [0], [0, 0, 1, 0], [], []>} : vector<16x8xf32>, vector<16x8xf32>, vector<16x16xf32> -> vector<16x16xf32>
    %45 = arith.addf %44, %4 : vector<16x16xf32>
    %cst_21 = arith.constant dense<0xFF800000> : vector<16xf32>
    %46 = vector.multi_reduction <maximumf>, %45, %cst_21 [1] : vector<16x16xf32> to vector<16xf32>
    %47 = vector.shape_cast %46 : vector<16xf32> to vector<16x1xf32>
    %48 = vector.broadcast %47 : vector<16x1xf32> to vector<16x16xf32>
    %49 = arith.subf %45, %48 : vector<16x16xf32>
    %50 = math.exp %49 : vector<16x16xf32>
    %cst_22 = arith.constant dense<0.000000e+00> : vector<16xf32>
    %51 = vector.multi_reduction <add>, %50, %cst_22 [1] : vector<16x16xf32> to vector<16xf32>
    %52 = vector.shape_cast %51 : vector<16xf32> to vector<16x1xf32>
    %53 = tpu.reciprocal %52 {approx = true} : vector<16x1xf32> -> vector<16x1xf32>
    %54 = vector.broadcast %53 : vector<16x1xf32> to vector<16x16xf32>
    %55 = arith.mulf %50, %54 : vector<16x16xf32>
    %cst_23 = arith.constant dense<0.000000e+00> : vector<16x8xf32>
    %56 = tpu.matmul %55, %43, %cst_23 {dimension_numbers = #tpu.dot_dimension_numbers<[1], [0], [0], [1], [0, 0, 1, 1], [], []>} : vector<16x16xf32>, vector<16x8xf32>, vector<16x8xf32> -> vector<16x8xf32>
    %57 = arith.truncf %56 : vector<16x8xf32> to vector<16x8xbf16>
    %58 = vector.extract_strided_slice %19 {offsets = [8, 0], sizes = [8, 32], strides = [1, 1]} : vector<32x32xbf16> to vector<8x32xbf16>
    %cst_24 = arith.constant dense<0.000000e+00> : vector<16x32xf32>
    %59 = tpu.matmul %57, %58, %cst_24 {dimension_numbers = #tpu.dot_dimension_numbers<[1], [0], [0], [1], [0, 0, 1, 1], [], []>} : vector<16x8xbf16>, vector<8x32xbf16>, vector<16x32xf32> -> vector<16x32xf32>
    %60 = arith.addf %40, %59 : vector<16x32xf32>
    %61 = vector.extract_strided_slice %15 {offsets = [0, 16], sizes = [16, 8], strides = [1, 1]} : vector<16x32xf32> to vector<16x8xf32>
    %62 = vector.extract_strided_slice %16 {offsets = [0, 16], sizes = [16, 8], strides = [1, 1]} : vector<16x32xf32> to vector<16x8xf32>
    %63 = vector.extract_strided_slice %17 {offsets = [0, 16], sizes = [16, 8], strides = [1, 1]} : vector<16x32xf32> to vector<16x8xf32>
    %cst_25 = arith.constant dense<0.000000e+00> : vector<16x16xf32>
    %64 = tpu.matmul %61, %62, %cst_25 {dimension_numbers = #tpu.dot_dimension_numbers<[1], [1], [0], [0], [0, 0, 1, 0], [], []>} : vector<16x8xf32>, vector<16x8xf32>, vector<16x16xf32> -> vector<16x16xf32>
    %65 = arith.addf %64, %4 : vector<16x16xf32>
    %cst_26 = arith.constant dense<0xFF800000> : vector<16xf32>
    %66 = vector.multi_reduction <maximumf>, %65, %cst_26 [1] : vector<16x16xf32> to vector<16xf32>
    %67 = vector.shape_cast %66 : vector<16xf32> to vector<16x1xf32>
    %68 = vector.broadcast %67 : vector<16x1xf32> to vector<16x16xf32>
    %69 = arith.subf %65, %68 : vector<16x16xf32>
    %70 = math.exp %69 : vector<16x16xf32>
    %cst_27 = arith.constant dense<0.000000e+00> : vector<16xf32>
    %71 = vector.multi_reduction <add>, %70, %cst_27 [1] : vector<16x16xf32> to vector<16xf32>
    %72 = vector.shape_cast %71 : vector<16xf32> to vector<16x1xf32>
    %73 = tpu.reciprocal %72 {approx = true} : vector<16x1xf32> -> vector<16x1xf32>
    %74 = vector.broadcast %73 : vector<16x1xf32> to vector<16x16xf32>
    %75 = arith.mulf %70, %74 : vector<16x16xf32>
    %cst_28 = arith.constant dense<0.000000e+00> : vector<16x8xf32>
    %76 = tpu.matmul %75, %63, %cst_28 {dimension_numbers = #tpu.dot_dimension_numbers<[1], [0], [0], [1], [0, 0, 1, 1], [], []>} : vector<16x16xf32>, vector<16x8xf32>, vector<16x8xf32> -> vector<16x8xf32>
    %77 = arith.truncf %76 : vector<16x8xf32> to vector<16x8xbf16>
    %78 = vector.extract_strided_slice %19 {offsets = [16, 0], sizes = [8, 32], strides = [1, 1]} : vector<32x32xbf16> to vector<8x32xbf16>
    %cst_29 = arith.constant dense<0.000000e+00> : vector<16x32xf32>
    %79 = tpu.matmul %77, %78, %cst_29 {dimension_numbers = #tpu.dot_dimension_numbers<[1], [0], [0], [1], [0, 0, 1, 1], [], []>} : vector<16x8xbf16>, vector<8x32xbf16>, vector<16x32xf32> -> vector<16x32xf32>
    %80 = arith.addf %60, %79 : vector<16x32xf32>
    %81 = vector.extract_strided_slice %15 {offsets = [0, 24], sizes = [16, 8], strides = [1, 1]} : vector<16x32xf32> to vector<16x8xf32>
    %82 = vector.extract_strided_slice %16 {offsets = [0, 24], sizes = [16, 8], strides = [1, 1]} : vector<16x32xf32> to vector<16x8xf32>
    %83 = vector.extract_strided_slice %17 {offsets = [0, 24], sizes = [16, 8], strides = [1, 1]} : vector<16x32xf32> to vector<16x8xf32>
    %cst_30 = arith.constant dense<0.000000e+00> : vector<16x16xf32>
    %84 = tpu.matmul %81, %82, %cst_30 {dimension_numbers = #tpu.dot_dimension_numbers<[1], [1], [0], [0], [0, 0, 1, 0], [], []>} : vector<16x8xf32>, vector<16x8xf32>, vector<16x16xf32> -> vector<16x16xf32>
    %85 = arith.addf %84, %4 : vector<16x16xf32>
    %cst_31 = arith.constant dense<0xFF800000> : vector<16xf32>
    %86 = vector.multi_reduction <maximumf>, %85, %cst_31 [1] : vector<16x16xf32> to vector<16xf32>
    %87 = vector.shape_cast %86 : vector<16xf32> to vector<16x1xf32>
    %88 = vector.broadcast %87 : vector<16x1xf32> to vector<16x16xf32>
    %89 = arith.subf %85, %88 : vector<16x16xf32>
    %90 = math.exp %89 : vector<16x16xf32>
    %cst_32 = arith.constant dense<0.000000e+00> : vector<16xf32>
    %91 = vector.multi_reduction <add>, %90, %cst_32 [1] : vector<16x16xf32> to vector<16xf32>
    %92 = vector.shape_cast %91 : vector<16xf32> to vector<16x1xf32>
    %93 = tpu.reciprocal %92 {approx = true} : vector<16x1xf32> -> vector<16x1xf32>
    %94 = vector.broadcast %93 : vector<16x1xf32> to vector<16x16xf32>
    %95 = arith.mulf %90, %94 : vector<16x16xf32>
    %cst_33 = arith.constant dense<0.000000e+00> : vector<16x8xf32>
    %96 = tpu.matmul %95, %83, %cst_33 {dimension_numbers = #tpu.dot_dimension_numbers<[1], [0], [0], [1], [0, 0, 1, 1], [], []>} : vector<16x16xf32>, vector<16x8xf32>, vector<16x8xf32> -> vector<16x8xf32>
    %97 = arith.truncf %96 : vector<16x8xf32> to vector<16x8xbf16>
    %98 = vector.extract_strided_slice %19 {offsets = [24, 0], sizes = [8, 32], strides = [1, 1]} : vector<32x32xbf16> to vector<8x32xbf16>
    %cst_34 = arith.constant dense<0.000000e+00> : vector<16x32xf32>
    %99 = tpu.matmul %97, %98, %cst_34 {dimension_numbers = #tpu.dot_dimension_numbers<[1], [0], [0], [1], [0, 0, 1, 1], [], []>} : vector<16x8xbf16>, vector<8x32xbf16>, vector<16x32xf32> -> vector<16x32xf32>
    %100 = arith.addf %80, %99 : vector<16x32xf32>
    %c0_35 = arith.constant 0 : index
    %c0_36 = arith.constant 0 : index
    %c0_37 = arith.constant 0 : index
    %101 = vector.load %arg9[%c0_35, %c0_36, %c0_37] : memref<1x1x32xf32, #tpu.memory_space<vmem>>, vector<1x1x32xf32>
    %102 = vector.shape_cast %101 : vector<1x1x32xf32> to vector<1x32xf32>
    %103 = vector.broadcast %102 : vector<1x32xf32> to vector<16x32xf32>
    %104 = arith.addf %100, %103 : vector<16x32xf32>
    %105 = arith.addf %104, %3 : vector<16x32xf32>
    %c0_38 = arith.constant 0 : index
    %c0_39 = arith.constant 0 : index
    %c0_40 = arith.constant 0 : index
    %106 = vector.load %arg10[%c0_38, %c0_39, %c0_40] : memref<1x1x32xf32, #tpu.memory_space<vmem>>, vector<1x1x32xf32>
    %107 = vector.shape_cast %106 : vector<1x1x32xf32> to vector<1x32xf32>
    %c0_41 = arith.constant 0 : index
    %c0_42 = arith.constant 0 : index
    %c0_43 = arith.constant 0 : index
    %108 = vector.load %arg11[%c0_41, %c0_42, %c0_43] : memref<1x1x32xf32, #tpu.memory_space<vmem>>, vector<1x1x32xf32>
    %109 = vector.shape_cast %108 : vector<1x1x32xf32> to vector<1x32xf32>
    %cst_44 = arith.constant dense<0.000000e+00> : vector<16xf32>
    %110 = vector.multi_reduction <add>, %105, %cst_44 [1] : vector<16x32xf32> to vector<16xf32>
    %111 = vector.shape_cast %110 : vector<16xf32> to vector<16x1xf32>
    %cst_45 = arith.constant 3.200000e+01 : f32
    %112 = vector.broadcast %cst_45 : f32 to vector<16x1xf32>
    %113 = arith.divf %111, %112 : vector<16x1xf32>
    %114 = vector.broadcast %113 : vector<16x1xf32> to vector<16x32xf32>
    %115 = arith.subf %105, %114 : vector<16x32xf32>
    %116 = arith.mulf %115, %115 : vector<16x32xf32>
    %cst_46 = arith.constant dense<0.000000e+00> : vector<16xf32>
    %117 = vector.multi_reduction <add>, %116, %cst_46 [1] : vector<16x32xf32> to vector<16xf32>
    %118 = vector.shape_cast %117 : vector<16xf32> to vector<16x1xf32>
    %cst_47 = arith.constant 3.200000e+01 : f32
    %119 = vector.broadcast %cst_47 : f32 to vector<16x1xf32>
    %120 = arith.divf %118, %119 : vector<16x1xf32>
    %cst_48 = arith.constant 1.000000e-07 : f32
    %121 = vector.broadcast %cst_48 : f32 to vector<16x1xf32>
    %122 = arith.addf %120, %121 : vector<16x1xf32>
    %123 = math.rsqrt %122 : vector<16x1xf32>
    %124 = vector.broadcast %123 : vector<16x1xf32> to vector<16x32xf32>
    %125 = arith.mulf %115, %124 : vector<16x32xf32>
    %126 = vector.broadcast %107 : vector<1x32xf32> to vector<16x32xf32>
    %127 = arith.mulf %125, %126 : vector<16x32xf32>
    %128 = vector.broadcast %109 : vector<1x32xf32> to vector<16x32xf32>
    %129 = arith.addf %127, %128 : vector<16x32xf32>
    %130 = arith.truncf %129 : vector<16x32xf32> to vector<16x32xbf16>
    %c0_49 = arith.constant 0 : index
    %c0_50 = arith.constant 0 : index
    %c0_51 = arith.constant 0 : index
    %131 = vector.load %arg12[%c0_49, %c0_50, %c0_51] : memref<1x32x64xbf16, #tpu.memory_space<vmem>>, vector<1x32x64xbf16>
    %132 = vector.shape_cast %131 : vector<1x32x64xbf16> to vector<32x64xbf16>
    %cst_52 = arith.constant dense<0.000000e+00> : vector<16x64xf32>
    %133 = tpu.matmul %130, %132, %cst_52 {dimension_numbers = #tpu.dot_dimension_numbers<[1], [0], [0], [1], [0, 0, 1, 1], [], []>} : vector<16x32xbf16>, vector<32x64xbf16>, vector<16x64xf32> -> vector<16x64xf32>
    %c0_53 = arith.constant 0 : index
    %c0_54 = arith.constant 0 : index
    %c0_55 = arith.constant 0 : index
    %134 = vector.load %arg13[%c0_53, %c0_54, %c0_55] : memref<1x1x64xf32, #tpu.memory_space<vmem>>, vector<1x1x64xf32>
    %135 = vector.shape_cast %134 : vector<1x1x64xf32> to vector<1x64xf32>
    %136 = vector.broadcast %135 : vector<1x64xf32> to vector<16x64xf32>
    %137 = arith.addf %133, %136 : vector<16x64xf32>
    %cst_56 = arith.constant 5.000000e-01 : f32
    %138 = vector.broadcast %cst_56 : f32 to vector<16x64xf32>
    %139 = arith.mulf %138, %137 : vector<16x64xf32>
    %cst_57 = arith.constant 4.471500e-02 : f32
    %140 = vector.broadcast %cst_57 : f32 to vector<16x64xf32>
    %141 = arith.mulf %140, %137 : vector<16x64xf32>
    %142 = arith.mulf %141, %137 : vector<16x64xf32>
    %143 = arith.mulf %142, %137 : vector<16x64xf32>
    %144 = arith.addf %137, %143 : vector<16x64xf32>
    %cst_58 = arith.constant 0.797884583 : f32
    %145 = vector.broadcast %cst_58 : f32 to vector<16x64xf32>
    %146 = arith.mulf %145, %144 : vector<16x64xf32>
    %147 = math.tanh %146 : vector<16x64xf32>
    %cst_59 = arith.constant 1.000000e+00 : f32
    %148 = vector.broadcast %cst_59 : f32 to vector<16x64xf32>
    %149 = arith.addf %148, %147 : vector<16x64xf32>
    %150 = arith.mulf %139, %149 : vector<16x64xf32>
    %151 = arith.truncf %150 : vector<16x64xf32> to vector<16x64xbf16>
    %c0_60 = arith.constant 0 : index
    %c0_61 = arith.constant 0 : index
    %c0_62 = arith.constant 0 : index
    %152 = vector.load %arg14[%c0_60, %c0_61, %c0_62] : memref<1x64x32xbf16, #tpu.memory_space<vmem>>, vector<1x64x32xbf16>
    %153 = vector.shape_cast %152 : vector<1x64x32xbf16> to vector<64x32xbf16>
    %cst_63 = arith.constant dense<0.000000e+00> : vector<16x32xf32>
    %154 = tpu.matmul %151, %153, %cst_63 {dimension_numbers = #tpu.dot_dimension_numbers<[1], [0], [0], [1], [0, 0, 1, 1], [], []>} : vector<16x64xbf16>, vector<64x32xbf16>, vector<16x32xf32> -> vector<16x32xf32>
    %c0_64 = arith.constant 0 : index
    %c0_65 = arith.constant 0 : index
    %c0_66 = arith.constant 0 : index
    %155 = vector.load %arg15[%c0_64, %c0_65, %c0_66] : memref<1x1x32xf32, #tpu.memory_space<vmem>>, vector<1x1x32xf32>
    %156 = vector.shape_cast %155 : vector<1x1x32xf32> to vector<1x32xf32>
    %157 = vector.broadcast %156 : vector<1x32xf32> to vector<16x32xf32>
    %158 = arith.addf %154, %157 : vector<16x32xf32>
    %159 = arith.addf %158, %129 : vector<16x32xf32>
    %c0_67 = arith.constant 0 : index
    %c0_68 = arith.constant 0 : index
    %c0_69 = arith.constant 0 : index
    %160 = vector.load %arg16[%c0_67, %c0_68, %c0_69] : memref<1x1x32xf32, #tpu.memory_space<vmem>>, vector<1x1x32xf32>
    %161 = vector.shape_cast %160 : vector<1x1x32xf32> to vector<1x32xf32>
    %c0_70 = arith.constant 0 : index
    %c0_71 = arith.constant 0 : index
    %c0_72 = arith.constant 0 : index
    %162 = vector.load %arg17[%c0_70, %c0_71, %c0_72] : memref<1x1x32xf32, #tpu.memory_space<vmem>>, vector<1x1x32xf32>
    %163 = vector.shape_cast %162 : vector<1x1x32xf32> to vector<1x32xf32>
    %cst_73 = arith.constant dense<0.000000e+00> : vector<16xf32>
    %164 = vector.multi_reduction <add>, %159, %cst_73 [1] : vector<16x32xf32> to vector<16xf32>
    %165 = vector.shape_cast %164 : vector<16xf32> to vector<16x1xf32>
    %cst_74 = arith.constant 3.200000e+01 : f32
    %166 = vector.broadcast %cst_74 : f32 to vector<16x1xf32>
    %167 = arith.divf %165, %166 : vector<16x1xf32>
    %168 = vector.broadcast %167 : vector<16x1xf32> to vector<16x32xf32>
    %169 = arith.subf %159, %168 : vector<16x32xf32>
    %170 = arith.mulf %169, %169 : vector<16x32xf32>
    %cst_75 = arith.constant dense<0.000000e+00> : vector<16xf32>
    %171 = vector.multi_reduction <add>, %170, %cst_75 [1] : vector<16x32xf32> to vector<16xf32>
    %172 = vector.shape_cast %171 : vector<16xf32> to vector<16x1xf32>
    %cst_76 = arith.constant 3.200000e+01 : f32
    %173 = vector.broadcast %cst_76 : f32 to vector<16x1xf32>
    %174 = arith.divf %172, %173 : vector<16x1xf32>
    %cst_77 = arith.constant 1.000000e-07 : f32
    %175 = vector.broadcast %cst_77 : f32 to vector<16x1xf32>
    %176 = arith.addf %174, %175 : vector<16x1xf32>
    %177 = math.rsqrt %176 : vector<16x1xf32>
    %178 = vector.broadcast %177 : vector<16x1xf32> to vector<16x32xf32>
    %179 = arith.mulf %169, %178 : vector<16x32xf32>
    %180 = vector.broadcast %161 : vector<1x32xf32> to vector<16x32xf32>
    %181 = arith.mulf %179, %180 : vector<16x32xf32>
    %182 = vector.broadcast %163 : vector<1x32xf32> to vector<16x32xf32>
    %183 = arith.addf %181, %182 : vector<16x32xf32>
    %c0_78 = arith.constant 0 : index
    %c0_79 = arith.constant 0 : index
    %184 = vector.load %arg19[%c0_78, %c0_79] : memref<16x32xf32, #tpu.memory_space<vmem>>, vector<16x32xf32>
    tpu.vector_store %arg19[%c0_78, %c0_79], %183 {strides = array<i32>} : memref<16x32xf32, #tpu.memory_space<vmem>>, vector<16x32xf32>,
    %c1_i32 = arith.constant 1 : i32
    %185 = arith.cmpi eq, %arg0, %c1_i32 : i32
    %186 = arith.extui %185 : i1 to i32
    %c0_i32_80 = arith.constant 0 : i32
    %187 = arith.cmpi ne, %186, %c0_i32_80 : i32
    scf.if %187 {
      %188 = vector.extract_strided_slice %183 {offsets = [0, 0], sizes = [1, 32], strides = [1, 1]} : vector<16x32xf32> to vector<1x32xf32>
      %c0_81 = arith.constant 0 : index
      %c0_82 = arith.constant 0 : index
      %189 = vector.load %arg18[%c0_81, %c0_82] : memref<2x32xf32, #tpu.memory_space<vmem>>, vector<1x32xf32>
      tpu.vector_store %arg18[%c0_81, %c0_82], %188 {strides = array<i32>} : memref<2x32xf32, #tpu.memory_space<vmem>>, vector<1x32xf32>,
      %190 = vector.extract_strided_slice %183 {offsets = [8, 0], sizes = [1, 32], strides = [1, 1]} : vector<16x32xf32> to vector<1x32xf32>
      %c1 = arith.constant 1 : index
      %c0_83 = arith.constant 0 : index
      %191 = vector.load %arg18[%c1, %c0_83] : memref<2x32xf32, #tpu.memory_space<vmem>>, vector<1x32xf32>
      tpu.vector_store %arg18[%c1, %c0_83], %190 {strides = array<i32>} : memref<2x32xf32, #tpu.memory_space<vmem>>, vector<1x32xf32>,
    } else {
    }
    return
  }
  func.func @transform_0(%arg0: i32) -> (i32, i32) {
    %c0_i32 = arith.constant 0 : i32
    %c0_i32_0 = arith.constant 0 : i32
    %c0_i32_1 = arith.constant 0 : i32
    return %c0_i32, %c0_i32_0 : i32, i32
  }
  func.func @transform_1(%arg0: i32) -> (i32, i32) {
    %c0_i32 = arith.constant 0 : i32
    %c0_i32_0 = arith.constant 0 : i32
    %c0_i32_1 = arith.constant 0 : i32
    return %c0_i32, %c0_i32_0 : i32, i32
  }
  func.func @transform_2(%arg0: i32) -> (i32, i32) {
    %c0_i32 = arith.constant 0 : i32
    %c0_i32_0 = arith.constant 0 : i32
    %c0_i32_1 = arith.constant 0 : i32
    return %c0_i32, %c0_i32_0 : i32, i32
  }
  func.func @transform_3(%arg0: i32) -> (i32, i32) {
    %c0_i32 = arith.constant 0 : i32
    %c0_i32_0 = arith.constant 0 : i32
    %c0_i32_1 = arith.constant 0 : i32
    return %c0_i32, %c0_i32_0 : i32, i32
  }
  func.func @transform_4(%arg0: i32) -> (i32, i32) {
    %c0_i32 = arith.constant 0 : i32
    %c0_i32_0 = arith.constant 0 : i32
    %c0_i32_1 = arith.constant 0 : i32
    return %c0_i32, %c0_i32_0 : i32, i32
  }
  func.func @transform_5(%arg0: i32) -> (i32, i32, i32) {
    %c0_i32 = arith.constant 0 : i32
    %c0_i32_0 = arith.constant 0 : i32
    %c0_i32_1 = arith.constant 0 : i32
    return %arg0, %c0_i32, %c0_i32_0 : i32, i32, i32
  }
  func.func @transform_6(%arg0: i32) -> (i32, i32, i32) {
    %c0_i32 = arith.constant 0 : i32
    %c0_i32_0 = arith.constant 0 : i32
    %c0_i32_1 = arith.constant 0 : i32
    return %arg0, %c0_i32, %c0_i32_0 : i32, i32, i32
  }
  func.func @transform_7(%arg0: i32) -> (i32, i32, i32) {
    %c0_i32 = arith.constant 0 : i32
    %c0_i32_0 = arith.constant 0 : i32
    %c0_i32_1 = arith.constant 0 : i32
    return %arg0, %c0_i32, %c0_i32_0 : i32, i32, i32
  }
  func.func @transform_8(%arg0: i32) -> (i32, i32, i32) {
    %c0_i32 = arith.constant 0 : i32
    %c0_i32_0 = arith.constant 0 : i32
    %c0_i32_1 = arith.constant 0 : i32
    return %arg0, %c0_i32, %c0_i32_0 : i32, i32, i32
  }
  func.func @transform_9(%arg0: i32) -> (i32, i32, i32) {
    %c0_i32 = arith.constant 0 : i32
    %c0_i32_0 = arith.constant 0 : i32
    %c0_i32_1 = arith.constant 0 : i32
    return %arg0, %c0_i32, %c0_i32_0 : i32, i32, i32
  }
  func.func @transform_10(%arg0: i32) -> (i32, i32, i32) {
    %c0_i32 = arith.constant 0 : i32
    %c0_i32_0 = arith.constant 0 : i32
    %c0_i32_1 = arith.constant 0 : i32
    return %arg0, %c0_i32, %c0_i32_0 : i32, i32, i32
  }
  func.func @transform_11(%arg0: i32) -> (i32, i32, i32) {
    %c0_i32 = arith.constant 0 : i32
    %c0_i32_0 = arith.constant 0 : i32
    %c0_i32_1 = arith.constant 0 : i32
    return %arg0, %c0_i32, %c0_i32_0 : i32, i32, i32
  }
  func.func @transform_12(%arg0: i32) -> (i32, i32, i32) {
    %c0_i32 = arith.constant 0 : i32
    %c0_i32_0 = arith.constant 0 : i32
    %c0_i32_1 = arith.constant 0 : i32
    return %arg0, %c0_i32, %c0_i32_0 : i32, i32, i32
  }
  func.func @transform_13(%arg0: i32) -> (i32, i32, i32) {
    %c0_i32 = arith.constant 0 : i32
    %c0_i32_0 = arith.constant 0 : i32
    %c0_i32_1 = arith.constant 0 : i32
    return %arg0, %c0_i32, %c0_i32_0 : i32, i32, i32
  }
  func.func @transform_14(%arg0: i32) -> (i32, i32, i32) {
    %c0_i32 = arith.constant 0 : i32
    %c0_i32_0 = arith.constant 0 : i32
    %c0_i32_1 = arith.constant 0 : i32
    return %arg0, %c0_i32, %c0_i32_0 : i32, i32, i32
  }
  func.func @transform_15(%arg0: i32) -> (i32, i32, i32) {
    %c0_i32 = arith.constant 0 : i32
    %c0_i32_0 = arith.constant 0 : i32
    %c0_i32_1 = arith.constant 0 : i32
    return %arg0, %c0_i32, %c0_i32_0 : i32, i32, i32
  }
  func.func @transform_16(%arg0: i32) -> (i32, i32, i32) {
    %c0_i32 = arith.constant 0 : i32
    %c0_i32_0 = arith.constant 0 : i32
    %c0_i32_1 = arith.constant 0 : i32
    return %arg0, %c0_i32, %c0_i32_0 : i32, i32, i32
  }
  func.func @transform_17(%arg0: i32) -> (i32, i32) {
    %c0_i32 = arith.constant 0 : i32
    %c0_i32_0 = arith.constant 0 : i32
    %c0_i32_1 = arith.constant 0 : i32
    return %c0_i32, %c0_i32_0 : i32, i32
  }
}

</mosaic_0001>

<llo_original>
// kernel: tpu_custom_call.1
$region0: #{tpu_custom_call.1}
  #allocation0 [shape = 'u32[]', space=smem, size = 0x4, offset = 0x4, fixed_abs, tag = 'smem constant byte address 0x4 - core index']
  #allocation1 [shape = 'u32[144,128]{1,0:T(1,128)}', space=vmem, size = 0x12000, scoped, tag = 'internal scratch']
  #allocation2 [shape = 'f32[16,32]{1,0:T(8,128)}', space=vmem, size = 0x2000, scoped, tag = 'scratch operand']
  %s0 = inlined_call_operand.vmem [shape: f32[16,32], index: 0, kind: input, shape index: {}]
  %s1 = inlined_call_operand.hbm [shape: f32[16,16], index: 1, kind: input, shape index: {}]
  %s2 = inlined_call_operand.vmem [shape: f32[16,1], index: 2, kind: input, shape index: {}]
  %s3 = inlined_call_operand.hbm [shape: f32[1,32], index: 3, kind: input, shape index: {}]
  %s4 = inlined_call_operand.hbm [shape: f32[1,32], index: 4, kind: input, shape index: {}]
  %s5 = inlined_call_operand.vmem [shape: bf16[2,32,96], index: 5, kind: input, shape index: {}]
  %s6 = inlined_call_operand.vmem [shape: f32[2,1,96], index: 6, kind: input, shape index: {}]
  %s7 = inlined_call_operand.vmem [shape: bf16[2,32,32], index: 7, kind: input, shape index: {}]
  %s8 = inlined_call_operand.vmem [shape: f32[2,1,32], index: 8, kind: input, shape index: {}]
  %s9 = inlined_call_operand.vmem [shape: f32[2,1,32], index: 9, kind: input, shape index: {}]
  %s10 = inlined_call_operand.vmem [shape: f32[2,1,32], index: 10, kind: input, shape index: {}]
  %s11 = inlined_call_operand.vmem [shape: bf16[2,32,64], index: 11, kind: input, shape index: {}]
  %s12 = inlined_call_operand.vmem [shape: f32[2,1,64], index: 12, kind: input, shape index: {}]
  %s13 = inlined_call_operand.vmem [shape: bf16[2,64,32], index: 13, kind: input, shape index: {}]
  %s14 = inlined_call_operand.vmem [shape: f32[2,1,32], index: 14, kind: input, shape index: {}]
  %s15 = inlined_call_operand.vmem [shape: f32[2,1,32], index: 15, kind: input, shape index: {}]
  %s16 = inlined_call_operand.vmem [shape: f32[2,1,32], index: 16, kind: input, shape index: {}]
  %s17 = inlined_call_operand.hbm [shape: f32[2,32], index: 17, kind: output, shape index: {}]
  %s18 = sld [smem:[#allocation0]]
  $region121: #{tpu_custom_call.1} parent=0
    _
  %s20 = ssub.s32 1, %s18
  %s21 = scalar_select 0, %s20, %s18
  $region1: #{tpu_custom_call.1} parent=0
    #allocation3 [shape = 'u8[8192]{0}', space=vmem, size = 0x2000, scoped, tag = 'input window, operand 1, single buffered']
    #allocation4 [shape = 's32[2]{0}', space=sflag, size = 0x8, scoped, tag = 'scoped memory for tpu_custom_call.1']
    #allocation5 [shape = 's32[2]{0}', space=sflag, size = 0x8, scoped, tag = 'scoped memory for tpu_custom_call.1']
    #allocation6 [shape = 'u8[512]{0}', space=vmem, size = 0x400, scoped, tag = 'input window, operand 3, single buffered']
    #allocation7 [shape = 's32[1]{0}', space=sflag, size = 0x4, scoped, tag = 'scoped memory for tpu_custom_call.1']
    #allocation8 [shape = 'u8[512]{0}', space=vmem, size = 0x400, scoped, tag = 'input window, operand 4, single buffered']
    #allocation9 [shape = 'u8[1024]{0}', space=vmem, size = 0x400, scoped, tag = 'output window, operand 0, single buffered']
    %22 = vsyncpa [#allocation4], 0
    %23 = vsyncpa [#allocation7], 0
    %24 = vsyncpa [#allocation5], 0
    loop: start=0, step=1, limit=4
    $region2: #{tpu_custom_call.1} parent=1 // loop_pre_header
      _
    $region3: #{tpu_custom_call.1} parent=1 // loop_header
      %s26 = sphi 0, %s30
      %p27 = scmp.ge.s32.totalorder %s26, 4
      %s34 = sphi 0, %s34
      %s36 = sphi 0, %s34
      %s37 = sphi 0, %s36
      %s51 = sphi 0, %s37
      %s55 = sphi 0, %s55
      %s57 = sphi 0, %s55
      %s58 = sphi 0, %s57
      %s72 = sphi 0, %s58
      %s76 = sphi 0, %s76
      %s78 = sphi 0, %s76
      %s79 = sphi 0, %s78
      %s93 = sphi 0, %s79
      %s97 = sphi 0, %s97
      %s99 = sphi 0, %s97
      %s100 = sphi 0, %s99
      %s114 = sphi 0, %s100
      %s118 = sphi 0, %s118
      %s120 = sphi 0, %s118
      %s121 = sphi 0, %s120
      %s135 = sphi 0, %s121
      %s141 = sphi 0, %s143
      %s144 = sphi 0, %s141
      %s145 = sphi 0, %s144
      %s161 = sphi 0, %s145
      %s167 = sphi 0, %s169
      %s170 = sphi 0, %s167
      %s171 = sphi 0, %s170
      %s187 = sphi 0, %s171
      %s193 = sphi 0, %s195
      %s196 = sphi 0, %s193
      %s197 = sphi 0, %s196
      %s213 = sphi 0, %s197
      %s219 = sphi 0, %s221
      %s222 = sphi 0, %s219
      %s223 = sphi 0, %s222
      %s239 = sphi 0, %s223
      %s245 = sphi 0, %s247
      %s248 = sphi 0, %s245
      %s249 = sphi 0, %s248
      %s265 = sphi 0, %s249
      %s271 = sphi 0, %s273
      %s274 = sphi 0, %s271
      %s275 = sphi 0, %s274
      %s291 = sphi 0, %s275
      %s297 = sphi 0, %s299
      %s300 = sphi 0, %s297
      %s301 = sphi 0, %s300
      %s317 = sphi 0, %s301
      %s323 = sphi 0, %s325
      %s326 = sphi 0, %s323
      %s327 = sphi 0, %s326
      %s343 = sphi 0, %s327
      %s349 = sphi 0, %s351
      %s352 = sphi 0, %s349
      %s353 = sphi 0, %s352
      %s369 = sphi 0, %s353
      %s375 = sphi 0, %s377
      %s378 = sphi 0, %s375
      %s379 = sphi 0, %s378
      %s395 = sphi 0, %s379
      %s401 = sphi 0, %s403
      %s404 = sphi 0, %s401
      %s405 = sphi 0, %s404
      %s421 = sphi 0, %s405
      %s427 = sphi 0, %s429
      %s430 = sphi 0, %s427
      %s431 = sphi 0, %s430
      %s447 = sphi 0, %s431
      %s451 = sphi 0, %s451
      %s453 = sphi 0, %s451
      %s454 = sphi 0, %s453
      %s468 = sphi 0, %s454
    $region4: #{tpu_custom_call.1} parent=1 // loop_header_branch
      %29 = sbr.rel (%p27) target = $region8
    $region5: #{tpu_custom_call.1} parent=1 // loop_body
      %s31 = ssub.s32 %s26, 1
      %s32 = ssub.s32 %s26, 2
      %s33 = sadd.s32 %s26, 1
      %s35 = sadd.s32 %s34, 1
      %p38 = scmp.eq.s32.totalorder %s26, 1
      %p39 = scmp.ne.s32.totalorder %s34, %s36
      %p40 = scmp.eq.s32.totalorder %s26, 0
      %p41 = por %p39, %p40
      %p42 = scmp.ne.s32.totalorder %s34, %s36
      %p43 = scmp.eq.s32.totalorder %s31, 1
      %p44 = por %p42, %p43
      %p45 = scmp.ne.s32.totalorder %s36, %s37
      %p46 = scmp.eq.s32.totalorder %s31, 0
      %p47 = por %p45, %p46
      %p48 = scmp.ne.s32.totalorder %s36, %s37
      %p49 = scmp.eq.s32.totalorder %s32, 1
      %p50 = por %p48, %p49
      %p52 = scmp.ne.s32.totalorder %s37, %s51
      %p53 = scmp.eq.s32.totalorder %s32, 0
      %p54 = por %p52, %p53
      %s56 = sadd.s32 %s55, 1
      %p59 = scmp.eq.s32.totalorder %s26, 1
      %p60 = scmp.ne.s32.totalorder %s55, %s57
      %p61 = scmp.eq.s32.totalorder %s26, 0
      %p62 = por %p60, %p61
      %p63 = scmp.ne.s32.totalorder %s55, %s57
      %p64 = scmp.eq.s32.totalorder %s31, 1
      %p65 = por %p63, %p64
      %p66 = scmp.ne.s32.totalorder %s57, %s58
      %p67 = scmp.eq.s32.totalorder %s31, 0
      %p68 = por %p66, %p67
      %p69 = scmp.ne.s32.totalorder %s57, %s58
      %p70 = scmp.eq.s32.totalorder %s32, 1
      %p71 = por %p69, %p70
      %p73 = scmp.ne.s32.totalorder %s58, %s72
      %p74 = scmp.eq.s32.totalorder %s32, 0
      %p75 = por %p73, %p74
      %s77 = sadd.s32 %s76, 1
      %p80 = scmp.eq.s32.totalorder %s26, 1
      %p81 = scmp.ne.s32.totalorder %s76, %s78
      %p82 = scmp.eq.s32.totalorder %s26, 0
      %p83 = por %p81, %p82
      %p84 = scmp.ne.s32.totalorder %s76, %s78
      %p85 = scmp.eq.s32.totalorder %s31, 1
      %p86 = por %p84, %p85
      %p87 = scmp.ne.s32.totalorder %s78, %s79
      %p88 = scmp.eq.s32.totalorder %s31, 0
      %p89 = por %p87, %p88
      %p90 = scmp.ne.s32.totalorder %s78, %s79
      %p91 = scmp.eq.s32.totalorder %s32, 1
      %p92 = por %p90, %p91
      %p94 = scmp.ne.s32.totalorder %s79, %s93
      %p95 = scmp.eq.s32.totalorder %s32, 0
      %p96 = por %p94, %p95
      %s98 = sadd.s32 %s97, 1
      %p101 = scmp.eq.s32.totalorder %s26, 1
      %p102 = scmp.ne.s32.totalorder %s97, %s99
      %p103 = scmp.eq.s32.totalorder %s26, 0
      %p104 = por %p102, %p103
      %p105 = scmp.ne.s32.totalorder %s97, %s99
      %p106 = scmp.eq.s32.totalorder %s31, 1
      %p107 = por %p105, %p106
      %p108 = scmp.ne.s32.totalorder %s99, %s100
      %p109 = scmp.eq.s32.totalorder %s31, 0
      %p110 = por %p108, %p109
      %p111 = scmp.ne.s32.totalorder %s99, %s100
      %p112 = scmp.eq.s32.totalorder %s32, 1
      %p113 = por %p111, %p112
      %p115 = scmp.ne.s32.totalorder %s100, %s114
      %p116 = scmp.eq.s32.totalorder %s32, 0
      %p117 = por %p115, %p116
      %s119 = sadd.s32 %s118, 1
      %p122 = scmp.eq.s32.totalorder %s26, 1
      %p123 = scmp.ne.s32.totalorder %s118, %s120
      %p124 = scmp.eq.s32.totalorder %s26, 0
      %p125 = por %p123, %p124
      %p126 = scmp.ne.s32.totalorder %s118, %s120
      %p127 = scmp.eq.s32.totalorder %s31, 1
      %p128 = por %p126, %p127
      %p129 = scmp.ne.s32.totalorder %s120, %s121
      %p130 = scmp.eq.s32.totalorder %s31, 0
      %p131 = por %p129, %p130
      %p132 = scmp.ne.s32.totalorder %s120, %s121
      %p133 = scmp.eq.s32.totalorder %s32, 1
      %p134 = por %p132, %p133
      %p136 = scmp.ne.s32.totalorder %s121, %s135
      %p137 = scmp.eq.s32.totalorder %s32, 0
      %p138 = por %p136, %p137
      %s139 = ssub.s32 %s26, %s33
      %p140 = scmp.eq.s32.totalorder %s139, 0
      %s142 = sadd.s32 %s141, 1
      %s143 = scalar_select %p140, %s141, %s142
      %p146 = pneg %p140
      %p147 = scmp.eq.s32.totalorder %s26, 1
      %p148 = por %p146, %p147
      %p149 = scmp.ne.s32.totalorder %s141, %s144
      %p150 = scmp.eq.s32.totalorder %s26, 0
      %p151 = por %p149, %p150
      %p152 = scmp.ne.s32.totalorder %s141, %s144
      %p153 = scmp.eq.s32.totalorder %s31, 1
      %p154 = por %p152, %p153
      %p155 = scmp.ne.s32.totalorder %s144, %s145
      %p156 = scmp.eq.s32.totalorder %s31, 0
      %p157 = por %p155, %p156
      %p158 = scmp.ne.s32.totalorder %s144, %s145
      %p159 = scmp.eq.s32.totalorder %s32, 1
      %p160 = por %p158, %p159
      %p162 = scmp.ne.s32.totalorder %s145, %s161
      %p163 = scmp.eq.s32.totalorder %s32, 0
      %p164 = por %p162, %p163
      %s165 = ssub.s32 %s26, %s33
      %p166 = scmp.eq.s32.totalorder %s165, 0
      %s168 = sadd.s32 %s167, 1
      %s169 = scalar_select %p166, %s167, %s168
      %p172 = pneg %p166
      %p173 = scmp.eq.s32.totalorder %s26, 1
      %p174 = por %p172, %p173
      %p175 = scmp.ne.s32.totalorder %s167, %s170
      %p176 = scmp.eq.s32.totalorder %s26, 0
      %p177 = por %p175, %p176
      %p178 = scmp.ne.s32.totalorder %s167, %s170
      %p179 = scmp.eq.s32.totalorder %s31, 1
      %p180 = por %p178, %p179
      %p181 = scmp.ne.s32.totalorder %s170, %s171
      %p182 = scmp.eq.s32.totalorder %s31, 0
      %p183 = por %p181, %p182
      %p184 = scmp.ne.s32.totalorder %s170, %s171
      %p185 = scmp.eq.s32.totalorder %s32, 1
      %p186 = por %p184, %p185
      %p188 = scmp.ne.s32.totalorder %s171, %s187
      %p189 = scmp.eq.s32.totalorder %s32, 0
      %p190 = por %p188, %p189
      %s191 = ssub.s32 %s26, %s33
      %p192 = scmp.eq.s32.totalorder %s191, 0
      %s194 = sadd.s32 %s193, 1
      %s195 = scalar_select %p192, %s193, %s194
      %p198 = pneg %p192
      %p199 = scmp.eq.s32.totalorder %s26, 1
      %p200 = por %p198, %p199
      %p201 = scmp.ne.s32.totalorder %s193, %s196
      %p202 = scmp.eq.s32.totalorder %s26, 0
      %p203 = por %p201, %p202
      %p204 = scmp.ne.s32.totalorder %s193, %s196
      %p205 = scmp.eq.s32.totalorder %s31, 1
      %p206 = por %p204, %p205
      %p207 = scmp.ne.s32.totalorder %s196, %s197
      %p208 = scmp.eq.s32.totalorder %s31, 0
      %p209 = por %p207, %p208
      %p210 = scmp.ne.s32.totalorder %s196, %s197
      %p211 = scmp.eq.s32.totalorder %s32, 1
      %p212 = por %p210, %p211
      %p214 = scmp.ne.s32.totalorder %s197, %s213
      %p215 = scmp.eq.s32.totalorder %s32, 0
      %p216 = por %p214, %p215
      %s217 = ssub.s32 %s26, %s33
      %p218 = scmp.eq.s32.totalorder %s217, 0
      %s220 = sadd.s32 %s219, 1
      %s221 = scalar_select %p218, %s219, %s220
      %p224 = pneg %p218
      %p225 = scmp.eq.s32.totalorder %s26, 1
      %p226 = por %p224, %p225
      %p227 = scmp.ne.s32.totalorder %s219, %s222
      %p228 = scmp.eq.s32.totalorder %s26, 0
      %p229 = por %p227, %p228
      %p230 = scmp.ne.s32.totalorder %s219, %s222
      %p231 = scmp.eq.s32.totalorder %s31, 1
      %p232 = por %p230, %p231
      %p233 = scmp.ne.s32.totalorder %s222, %s223
      %p234 = scmp.eq.s32.totalorder %s31, 0
      %p235 = por %p233, %p234
      %p236 = scmp.ne.s32.totalorder %s222, %s223
      %p237 = scmp.eq.s32.totalorder %s32, 1
      %p238 = por %p236, %p237
      %p240 = scmp.ne.s32.totalorder %s223, %s239
      %p241 = scmp.eq.s32.totalorder %s32, 0
      %p242 = por %p240, %p241
      %s243 = ssub.s32 %s26, %s33
      %p244 = scmp.eq.s32.totalorder %s243, 0
      %s246 = sadd.s32 %s245, 1
      %s247 = scalar_select %p244, %s245, %s246
      %p250 = pneg %p244
      %p251 = scmp.eq.s32.totalorder %s26, 1
      %p252 = por %p250, %p251
      %p253 = scmp.ne.s32.totalorder %s245, %s248
      %p254 = scmp.eq.s32.totalorder %s26, 0
      %p255 = por %p253, %p254
      %p256 = scmp.ne.s32.totalorder %s245, %s248
      %p257 = scmp.eq.s32.totalorder %s31, 1
      %p258 = por %p256, %p257
      %p259 = scmp.ne.s32.totalorder %s248, %s249
      %p260 = scmp.eq.s32.totalorder %s31, 0
      %p261 = por %p259, %p260
      %p262 = scmp.ne.s32.totalorder %s248, %s249
      %p263 = scmp.eq.s32.totalorder %s32, 1
      %p264 = por %p262, %p263
      %p266 = scmp.ne.s32.totalorder %s249, %s265
      %p267 = scmp.eq.s32.totalorder %s32, 0
      %p268 = por %p266, %p267
      %s269 = ssub.s32 %s26, %s33
      %p270 = scmp.eq.s32.totalorder %s269, 0
      %s272 = sadd.s32 %s271, 1
      %s273 = scalar_select %p270, %s271, %s272
      %p276 = pneg %p270
      %p277 = scmp.eq.s32.totalorder %s26, 1
      %p278 = por %p276, %p277
      %p279 = scmp.ne.s32.totalorder %s271, %s274
      %p280 = scmp.eq.s32.totalorder %s26, 0
      %p281 = por %p279, %p280
      %p282 = scmp.ne.s32.totalorder %s271, %s274
      %p283 = scmp.eq.s32.totalorder %s31, 1
      %p284 = por %p282, %p283
      %p285 = scmp.ne.s32.totalorder %s274, %s275
      %p286 = scmp.eq.s32.totalorder %s31, 0
      %p287 = por %p285, %p286
      %p288 = scmp.ne.s32.totalorder %s274, %s275
      %p289 = scmp.eq.s32.totalorder %s32, 1
      %p290 = por %p288, %p289
      %p292 = scmp.ne.s32.totalorder %s275, %s291
      %p293 = scmp.eq.s32.totalorder %s32, 0
      %p294 = por %p292, %p293
      %s295 = ssub.s32 %s26, %s33
      %p296 = scmp.eq.s32.totalorder %s295, 0
      %s298 = sadd.s32 %s297, 1
      %s299 = scalar_select %p296, %s297, %s298
      %p302 = pneg %p296
      %p303 = scmp.eq.s32.totalorder %s26, 1
      %p304 = por %p302, %p303
      %p305 = scmp.ne.s32.totalorder %s297, %s300
      %p306 = scmp.eq.s32.totalorder %s26, 0
      %p307 = por %p305, %p306
      %p308 = scmp.ne.s32.totalorder %s297, %s300
      %p309 = scmp.eq.s32.totalorder %s31, 1
      %p310 = por %p308, %p309
      %p311 = scmp.ne.s32.totalorder %s300, %s301
      %p312 = scmp.eq.s32.totalorder %s31, 0
      %p313 = por %p311, %p312
      %p314 = scmp.ne.s32.totalorder %s300, %s301
      %p315 = scmp.eq.s32.totalorder %s32, 1
      %p316 = por %p314, %p315
      %p318 = scmp.ne.s32.totalorder %s301, %s317
      %p319 = scmp.eq.s32.totalorder %s32, 0
      %p320 = por %p318, %p319
      %s321 = ssub.s32 %s26, %s33
      %p322 = scmp.eq.s32.totalorder %s321, 0
      %s324 = sadd.s32 %s323, 1
      %s325 = scalar_select %p322, %s323, %s324
      %p328 = pneg %p322
      %p329 = scmp.eq.s32.totalorder %s26, 1
      %p330 = por %p328, %p329
      %p331 = scmp.ne.s32.totalorder %s323, %s326
      %p332 = scmp.eq.s32.totalorder %s26, 0
      %p333 = por %p331, %p332
      %p334 = scmp.ne.s32.totalorder %s323, %s326
      %p335 = scmp.eq.s32.totalorder %s31, 1
      %p336 = por %p334, %p335
      %p337 = scmp.ne.s32.totalorder %s326, %s327
      %p338 = scmp.eq.s32.totalorder %s31, 0
      %p339 = por %p337, %p338
      %p340 = scmp.ne.s32.totalorder %s326, %s327
      %p341 = scmp.eq.s32.totalorder %s32, 1
      %p342 = por %p340, %p341
      %p344 = scmp.ne.s32.totalorder %s327, %s343
      %p345 = scmp.eq.s32.totalorder %s32, 0
      %p346 = por %p344, %p345
      %s347 = ssub.s32 %s26, %s33
      %p348 = scmp.eq.s32.totalorder %s347, 0
      %s350 = sadd.s32 %s349, 1
      %s351 = scalar_select %p348, %s349, %s350
      %p354 = pneg %p348
      %p355 = scmp.eq.s32.totalorder %s26, 1
      %p356 = por %p354, %p355
      %p357 = scmp.ne.s32.totalorder %s349, %s352
      %p358 = scmp.eq.s32.totalorder %s26, 0
      %p359 = por %p357, %p358
      %p360 = scmp.ne.s32.totalorder %s349, %s352
      %p361 = scmp.eq.s32.totalorder %s31, 1
      %p362 = por %p360, %p361
      %p363 = scmp.ne.s32.totalorder %s352, %s353
      %p364 = scmp.eq.s32.totalorder %s31, 0
      %p365 = por %p363, %p364
      %p366 = scmp.ne.s32.totalorder %s352, %s353
      %p367 = scmp.eq.s32.totalorder %s32, 1
      %p368 = por %p366, %p367
      %p370 = scmp.ne.s32.totalorder %s353, %s369
      %p371 = scmp.eq.s32.totalorder %s32, 0
      %p372 = por %p370, %p371
      %s373 = ssub.s32 %s26, %s33
      %p374 = scmp.eq.s32.totalorder %s373, 0
      %s376 = sadd.s32 %s375, 1
      %s377 = scalar_select %p374, %s375, %s376
      %p380 = pneg %p374
      %p381 = scmp.eq.s32.totalorder %s26, 1
      %p382 = por %p380, %p381
      %p383 = scmp.ne.s32.totalorder %s375, %s378
      %p384 = scmp.eq.s32.totalorder %s26, 0
      %p385 = por %p383, %p384
      %p386 = scmp.ne.s32.totalorder %s375, %s378
      %p387 = scmp.eq.s32.totalorder %s31, 1
      %p388 = por %p386, %p387
      %p389 = scmp.ne.s32.totalorder %s378, %s379
      %p390 = scmp.eq.s32.totalorder %s31, 0
      %p391 = por %p389, %p390
      %p392 = scmp.ne.s32.totalorder %s378, %s379
      %p393 = scmp.eq.s32.totalorder %s32, 1
      %p394 = por %p392, %p393
      %p396 = scmp.ne.s32.totalorder %s379, %s395
      %p397 = scmp.eq.s32.totalorder %s32, 0
      %p398 = por %p396, %p397
      %s399 = ssub.s32 %s26, %s33
      %p400 = scmp.eq.s32.totalorder %s399, 0
      %s402 = sadd.s32 %s401, 1
      %s403 = scalar_select %p400, %s401, %s402
      %p406 = pneg %p400
      %p407 = scmp.eq.s32.totalorder %s26, 1
      %p408 = por %p406, %p407
      %p409 = scmp.ne.s32.totalorder %s401, %s404
      %p410 = scmp.eq.s32.totalorder %s26, 0
      %p411 = por %p409, %p410
      %p412 = scmp.ne.s32.totalorder %s401, %s404
      %p413 = scmp.eq.s32.totalorder %s31, 1
      %p414 = por %p412, %p413
      %p415 = scmp.ne.s32.totalorder %s404, %s405
      %p416 = scmp.eq.s32.totalorder %s31, 0
      %p417 = por %p415, %p416
      %p418 = scmp.ne.s32.totalorder %s404, %s405
      %p419 = scmp.eq.s32.totalorder %s32, 1
      %p420 = por %p418, %p419
      %p422 = scmp.ne.s32.totalorder %s405, %s421
      %p423 = scmp.eq.s32.totalorder %s32, 0
      %p424 = por %p422, %p423
      %s425 = ssub.s32 %s26, %s33
      %p426 = scmp.eq.s32.totalorder %s425, 0
      %s428 = sadd.s32 %s427, 1
      %s429 = scalar_select %p426, %s427, %s428
      %p432 = pneg %p426
      %p433 = scmp.eq.s32.totalorder %s26, 1
      %p434 = por %p432, %p433
      %p435 = scmp.ne.s32.totalorder %s427, %s430
      %p436 = scmp.eq.s32.totalorder %s26, 0
      %p437 = por %p435, %p436
      %p438 = scmp.ne.s32.totalorder %s427, %s430
      %p439 = scmp.eq.s32.totalorder %s31, 1
      %p440 = por %p438, %p439
      %p441 = scmp.ne.s32.totalorder %s430, %s431
      %p442 = scmp.eq.s32.totalorder %s31, 0
      %p443 = por %p441, %p442
      %p444 = scmp.ne.s32.totalorder %s430, %s431
      %p445 = scmp.eq.s32.totalorder %s32, 1
      %p446 = por %p444, %p445
      %p448 = scmp.ne.s32.totalorder %s431, %s447
      %p449 = scmp.eq.s32.totalorder %s32, 0
      %p450 = por %p448, %p449
      %s452 = sadd.s32 %s451, 1
      %p455 = scmp.eq.s32.totalorder %s26, 1
      %p456 = scmp.ne.s32.totalorder %s451, %s453
      %p457 = scmp.eq.s32.totalorder %s26, 0
      %p458 = por %p456, %p457
      %p459 = scmp.ne.s32.totalorder %s451, %s453
      %p460 = scmp.eq.s32.totalorder %s31, 1
      %p461 = por %p459, %p460
      %p462 = scmp.ne.s32.totalorder %s453, %s454
      %p463 = scmp.eq.s32.totalorder %s31, 0
      %p464 = por %p462, %p463
      %p465 = scmp.ne.s32.totalorder %s453, %s454
      %p466 = scmp.eq.s32.totalorder %s32, 1
      %p467 = por %p465, %p466
      %p469 = scmp.ne.s32.totalorder %s454, %s468
      %p470 = scmp.eq.s32.totalorder %s32, 0
      %p471 = por %p469, %p470
      %p472 = scmp.le.s32.totalorder 1, %s26
      %p473 = scmp.lt.s32.totalorder %s26, 3
      %p474 = pnand %p472, %p473
      %p475 = pneg %p474
      // Predicated region
      $region9: #{tpu_custom_call.1} parent=5 // pred_check
        _
      $region10: #{tpu_custom_call.1} parent=5 // pred_check_branch
        %477 = sbr.rel (%p474) target = $region12
      $region11: #{tpu_custom_call.1} parent=5 // pred_region
        %s478 = ssub.s32 %s26, 1
        // Predicated region
        $region13: #{tpu_custom_call.1} parent=11 // pred_check
          %p479 = pneg %p47
        $region14: #{tpu_custom_call.1} parent=11 // pred_check_branch
          %481 = sbr.rel (%p479) target = $region16
        $region15: #{tpu_custom_call.1} parent=11 // pred_region
          _
        $region16: #{tpu_custom_call.1} parent=11 // pred_fallthru
          _
        // Predicated region
        $region17: #{tpu_custom_call.1} parent=11 // pred_check
          %p482 = pneg %p68
        $region18: #{tpu_custom_call.1} parent=11 // pred_check_branch
          %484 = sbr.rel (%p482) target = $region20
        $region19: #{tpu_custom_call.1} parent=11 // pred_region
          %s486 = ssub.s32 256, 256
          %487 = vsyncadd [#allocation4], %s486
          %s488 = sshll.u32 [#allocation3], 4
          %s489 = int_to_ptr.vmem [resolvable:$true] %s488
          %494 = dma.hbm_to_vmem [thread:$0]  %s1, 256, %s489, [#allocation4], 128, 128, 8
        $region20: #{tpu_custom_call.1} parent=11 // pred_fallthru
          _
        // Predicated region
        $region21: #{tpu_custom_call.1} parent=11 // pred_check
          %p495 = pneg %p89
        $region22: #{tpu_custom_call.1} parent=11 // pred_check_branch
          %497 = sbr.rel (%p495) target = $region24
        $region23: #{tpu_custom_call.1} parent=11 // pred_region
          _
        $region24: #{tpu_custom_call.1} parent=11 // pred_fallthru
          _
        // Predicated region
        $region25: #{tpu_custom_call.1} parent=11 // pred_check
          %p498 = pneg %p110
        $region26: #{tpu_custom_call.1} parent=11 // pred_check_branch
          %500 = sbr.rel (%p498) target = $region28
        $region27: #{tpu_custom_call.1} parent=11 // pred_region
          %s502 = ssub.s32 16, 16
          %503 = vsyncadd [#allocation7], %s502
          %s505 = sshll.u32 [#allocation6], 4
          %s506 = int_to_ptr.vmem [resolvable:$true] %s505
          %508 = dma.hbm_to_vmem [thread:$0]  %s3, 16, %s506, [#allocation7]
        $region28: #{tpu_custom_call.1} parent=11 // pred_fallthru
          _
        // Predicated region
        $region29: #{tpu_custom_call.1} parent=11 // pred_check
          %p509 = pneg %p131
        $region30: #{tpu_custom_call.1} parent=11 // pred_check_branch
          %511 = sbr.rel (%p509) target = $region32
        $region31: #{tpu_custom_call.1} parent=11 // pred_region
          %s513 = ssub.s32 16, 16
          %514 = vsyncadd [#allocation7], %s513
          %s516 = sshll.u32 [#allocation8], 4
          %s517 = int_to_ptr.vmem [resolvable:$true] %s516
          %519 = dma.hbm_to_vmem [thread:$0]  %s4, 16, %s517, [#allocation7]
        $region32: #{tpu_custom_call.1} parent=11 // pred_fallthru
          _
      $region12: #{tpu_custom_call.1} parent=5 // pred_fallthru
        _
      %p520 = scmp.lt.s32.totalorder %s26, 2
      // Predicated region
      $region33: #{tpu_custom_call.1} parent=5 // pred_check
        %p521 = pneg %p520
      $region34: #{tpu_custom_call.1} parent=5 // pred_check_branch
        %523 = sbr.rel (%p521) target = $region36
      $region35: #{tpu_custom_call.1} parent=5 // pred_region
        // Predicated region
        $region37: #{tpu_custom_call.1} parent=35 // pred_check
          %p524 = pneg %p151
        $region38: #{tpu_custom_call.1} parent=35 // pred_check_branch
          %526 = sbr.rel (%p524) target = $region40
        $region39: #{tpu_custom_call.1} parent=35 // pred_region
          %p527 = scmp.lt.s32.totalorder %s26, 1
          %s528 = scalar_select %p527, %s26, 1
          %s529 = smul.addr %s528, 4
          %s530 = smul.addr %s529, 4
          %s531 = scalar_lea.vmem %s5, %s530
        $region40: #{tpu_custom_call.1} parent=35 // pred_fallthru
          _
        // Predicated region
        $region41: #{tpu_custom_call.1} parent=35 // pred_check
          %p532 = pneg %p177
        $region42: #{tpu_custom_call.1} parent=35 // pred_check_branch
          %534 = sbr.rel (%p532) target = $region44
        $region43: #{tpu_custom_call.1} parent=35 // pred_region
          %p535 = scmp.lt.s32.totalorder %s26, 1
          %s536 = scalar_select %p535, %s26, 1
          %s537 = scalar_lea.vmem %s6, %s536
        $region44: #{tpu_custom_call.1} parent=35 // pred_fallthru
          _
        // Predicated region
        $region45: #{tpu_custom_call.1} parent=35 // pred_check
          %p538 = pneg %p203
        $region46: #{tpu_custom_call.1} parent=35 // pred_check_branch
          %540 = sbr.rel (%p538) target = $region48
        $region47: #{tpu_custom_call.1} parent=35 // pred_region
          %p541 = scmp.lt.s32.totalorder %s26, 1
          %s542 = scalar_select %p541, %s26, 1
          %s543 = smul.addr %s542, 4
          %s544 = smul.addr %s543, 4
          %s545 = scalar_lea.vmem %s7, %s544
        $region48: #{tpu_custom_call.1} parent=35 // pred_fallthru
          _
        // Predicated region
        $region49: #{tpu_custom_call.1} parent=35 // pred_check
          %p546 = pneg %p229
        $region50: #{tpu_custom_call.1} parent=35 // pred_check_branch
          %548 = sbr.rel (%p546) target = $region52
        $region51: #{tpu_custom_call.1} parent=35 // pred_region
          %p549 = scmp.lt.s32.totalorder %s26, 1
          %s550 = scalar_select %p549, %s26, 1
          %s551 = scalar_lea.vmem %s8, %s550
        $region52: #{tpu_custom_call.1} parent=35 // pred_fallthru
          _
        // Predicated region
        $region53: #{tpu_custom_call.1} parent=35 // pred_check
          %p552 = pneg %p255
        $region54: #{tpu_custom_call.1} parent=35 // pred_check_branch
          %554 = sbr.rel (%p552) target = $region56
        $region55: #{tpu_custom_call.1} parent=35 // pred_region
          %p555 = scmp.lt.s32.totalorder %s26, 1
          %s556 = scalar_select %p555, %s26, 1
          %s557 = scalar_lea.vmem %s9, %s556
        $region56: #{tpu_custom_call.1} parent=35 // pred_fallthru
          _
        // Predicated region
        $region57: #{tpu_custom_call.1} parent=35 // pred_check
          %p558 = pneg %p281
        $region58: #{tpu_custom_call.1} parent=35 // pred_check_branch
          %560 = sbr.rel (%p558) target = $region60
        $region59: #{tpu_custom_call.1} parent=35 // pred_region
          %p561 = scmp.lt.s32.totalorder %s26, 1
          %s562 = scalar_select %p561, %s26, 1
          %s563 = scalar_lea.vmem %s10, %s562
        $region60: #{tpu_custom_call.1} parent=35 // pred_fallthru
          _
        // Predicated region
        $region61: #{tpu_custom_call.1} parent=35 // pred_check
          %p564 = pneg %p307
        $region62: #{tpu_custom_call.1} parent=35 // pred_check_branch
          %566 = sbr.rel (%p564) target = $region64
        $region63: #{tpu_custom_call.1} parent=35 // pred_region
          %p567 = scmp.lt.s32.totalorder %s26, 1
          %s568 = scalar_select %p567, %s26, 1
          %s569 = smul.addr %s568, 4
          %s570 = smul.addr %s569, 4
          %s571 = scalar_lea.vmem %s11, %s570
        $region64: #{tpu_custom_call.1} parent=35 // pred_fallthru
          _
        // Predicated region
        $region65: #{tpu_custom_call.1} parent=35 // pred_check
          %p572 = pneg %p333
        $region66: #{tpu_custom_call.1} parent=35 // pred_check_branch
          %574 = sbr.rel (%p572) target = $region68
        $region67: #{tpu_custom_call.1} parent=35 // pred_region
          %p575 = scmp.lt.s32.totalorder %s26, 1
          %s576 = scalar_select %p575, %s26, 1
          %s577 = scalar_lea.vmem %s12, %s576
        $region68: #{tpu_custom_call.1} parent=35 // pred_fallthru
          _
        // Predicated region
        $region69: #{tpu_custom_call.1} parent=35 // pred_check
          %p578 = pneg %p359
        $region70: #{tpu_custom_call.1} parent=35 // pred_check_branch
          %580 = sbr.rel (%p578) target = $region72
        $region71: #{tpu_custom_call.1} parent=35 // pred_region
          %p581 = scmp.lt.s32.totalorder %s26, 1
          %s582 = scalar_select %p581, %s26, 1
          %s583 = smul.addr %s582, 8
          %s584 = smul.addr %s583, 4
          %s585 = scalar_lea.vmem %s13, %s584
        $region72: #{tpu_custom_call.1} parent=35 // pred_fallthru
          _
        // Predicated region
        $region73: #{tpu_custom_call.1} parent=35 // pred_check
          %p586 = pneg %p385
        $region74: #{tpu_custom_call.1} parent=35 // pred_check_branch
          %588 = sbr.rel (%p586) target = $region76
        $region75: #{tpu_custom_call.1} parent=35 // pred_region
          %p589 = scmp.lt.s32.totalorder %s26, 1
          %s590 = scalar_select %p589, %s26, 1
          %s591 = scalar_lea.vmem %s14, %s590
        $region76: #{tpu_custom_call.1} parent=35 // pred_fallthru
          _
        // Predicated region
        $region77: #{tpu_custom_call.1} parent=35 // pred_check
          %p592 = pneg %p411
        $region78: #{tpu_custom_call.1} parent=35 // pred_check_branch
          %594 = sbr.rel (%p592) target = $region80
        $region79: #{tpu_custom_call.1} parent=35 // pred_region
          %p595 = scmp.lt.s32.totalorder %s26, 1
          %s596 = scalar_select %p595, %s26, 1
          %s597 = scalar_lea.vmem %s15, %s596
        $region80: #{tpu_custom_call.1} parent=35 // pred_fallthru
          _
        // Predicated region
        $region81: #{tpu_custom_call.1} parent=35 // pred_check
          %p598 = pneg %p437
        $region82: #{tpu_custom_call.1} parent=35 // pred_check_branch
          %600 = sbr.rel (%p598) target = $region84
        $region83: #{tpu_custom_call.1} parent=35 // pred_region
          %p601 = scmp.lt.s32.totalorder %s26, 1
          %s602 = scalar_select %p601, %s26, 1
          %s603 = scalar_lea.vmem %s16, %s602
        $region84: #{tpu_custom_call.1} parent=35 // pred_fallthru
          _
      $region36: #{tpu_custom_call.1} parent=5 // pred_fallthru
        _
      %p604 = scmp.le.s32.totalorder 1, %s26
      %p605 = scmp.lt.s32.totalorder %s26, 3
      %p606 = pnand %p604, %p605
      %p607 = pneg %p606
      // Predicated region
      $region85: #{tpu_custom_call.1} parent=5 // pred_check
        _
      $region86: #{tpu_custom_call.1} parent=5 // pred_check_branch
        %609 = sbr.rel (%p606) target = $region88
      $region87: #{tpu_custom_call.1} parent=5 // pred_region
        %s610 = ssub.s32 %s26, 1
        // Predicated region
        $region89: #{tpu_custom_call.1} parent=87 // pred_check
          %p611 = pneg %p68
        $region90: #{tpu_custom_call.1} parent=87 // pred_check_branch
          %613 = sbr.rel (%p611) target = $region92
        $region91: #{tpu_custom_call.1} parent=87 // pred_region
          %614 = dma.done [#allocation4], 256
        $region92: #{tpu_custom_call.1} parent=87 // pred_fallthru
          _
        // Predicated region
        $region93: #{tpu_custom_call.1} parent=87 // pred_check
          %p615 = pneg %p110
        $region94: #{tpu_custom_call.1} parent=87 // pred_check_branch
          %617 = sbr.rel (%p615) target = $region96
        $region95: #{tpu_custom_call.1} parent=87 // pred_region
          %618 = dma.done [#allocation7], 16
        $region96: #{tpu_custom_call.1} parent=87 // pred_fallthru
          _
        // Predicated region
        $region97: #{tpu_custom_call.1} parent=87 // pred_check
          %p619 = pneg %p131
        $region98: #{tpu_custom_call.1} parent=87 // pred_check_branch
          %621 = sbr.rel (%p619) target = $region100
        $region99: #{tpu_custom_call.1} parent=87 // pred_region
          %622 = dma.done [#allocation7], 16
        $region100: #{tpu_custom_call.1} parent=87 // pred_fallthru
          _
        %p623 = pneg %p47
        %p624 = pneg %p44
        %p625 = pneg %p68
        %p626 = pneg %p65
        %p627 = pneg %p89
        %p628 = pneg %p86
        %p629 = pneg %p110
        %p630 = pneg %p107
        %p631 = pneg %p131
        %p632 = pneg %p128
        %p633 = scmp.lt.s32.totalorder %s31, 1
        %s634 = scalar_select %p633, %s31, 1
        %s635 = smul.addr %s634, 4
        %s636 = smul.addr %s635, 4
        %s637 = scalar_lea.vmem %s5, %s636
        %p638 = pneg %p157
        %p639 = pneg %p154
        %p640 = scmp.lt.s32.totalorder %s31, 1
        %s641 = scalar_select %p640, %s31, 1
        %s642 = scalar_lea.vmem %s6, %s641
        %p643 = pneg %p183
        %p644 = pneg %p180
        %p645 = scmp.lt.s32.totalorder %s31, 1
        %s646 = scalar_select %p645, %s31, 1
        %s647 = smul.addr %s646, 4
        %s648 = smul.addr %s647, 4
        %s649 = scalar_lea.vmem %s7, %s648
        %p650 = pneg %p209
        %p651 = pneg %p206
        %p652 = scmp.lt.s32.totalorder %s31, 1
        %s653 = scalar_select %p652, %s31, 1
        %s654 = scalar_lea.vmem %s8, %s653
        %p655 = pneg %p235
        %p656 = pneg %p232
        %p657 = scmp.lt.s32.totalorder %s31, 1
        %s658 = scalar_select %p657, %s31, 1
        %s659 = scalar_lea.vmem %s9, %s658
        %p660 = pneg %p261
        %p661 = pneg %p258
        %p662 = scmp.lt.s32.totalorder %s31, 1
        %s663 = scalar_select %p662, %s31, 1
        %s664 = scalar_lea.vmem %s10, %s663
        %p665 = pneg %p287
        %p666 = pneg %p284
        %p667 = scmp.lt.s32.totalorder %s31, 1
        %s668 = scalar_select %p667, %s31, 1
        %s669 = smul.addr %s668, 4
        %s670 = smul.addr %s669, 4
        %s671 = scalar_lea.vmem %s11, %s670
        %p672 = pneg %p313
        %p673 = pneg %p310
        %p674 = scmp.lt.s32.totalorder %s31, 1
        %s675 = scalar_select %p674, %s31, 1
        %s676 = scalar_lea.vmem %s12, %s675
        %p677 = pneg %p339
        %p678 = pneg %p336
        %p679 = scmp.lt.s32.totalorder %s31, 1
        %s680 = scalar_select %p679, %s31, 1
        %s681 = smul.addr %s680, 8
        %s682 = smul.addr %s681, 4
        %s683 = scalar_lea.vmem %s13, %s682
        %p684 = pneg %p365
        %p685 = pneg %p362
        %p686 = scmp.lt.s32.totalorder %s31, 1
        %s687 = scalar_select %p686, %s31, 1
        %s688 = scalar_lea.vmem %s14, %s687
        %p689 = pneg %p391
        %p690 = pneg %p388
        %p691 = scmp.lt.s32.totalorder %s31, 1
        %s692 = scalar_select %p691, %s31, 1
        %s693 = scalar_lea.vmem %s15, %s692
        %p694 = pneg %p417
        %p695 = pneg %p414
        %p696 = scmp.lt.s32.totalorder %s31, 1
        %s697 = scalar_select %p696, %s31, 1
        %s698 = scalar_lea.vmem %s16, %s697
        %p699 = pneg %p443
        %p700 = pneg %p440
        %p701 = pneg %p464
        %p702 = pneg %p461
        %p703 = scmp.lt.s32.totalorder %s31, 1
        %s704 = scalar_select %p703, %s31, 1
        %s705 = smul.addr %s704, 4
        %s706 = smul.addr %s705, 4
        %s707 = scalar_lea.vmem %s5, %s706
        %p708 = scmp.lt.s32.totalorder %s31, 1
        %s709 = scalar_select %p708, %s31, 1
        %s710 = scalar_lea.vmem %s6, %s709
        %p711 = scmp.lt.s32.totalorder %s31, 1
        %s712 = scalar_select %p711, %s31, 1
        %s713 = smul.addr %s712, 4
        %s714 = smul.addr %s713, 4
        %s715 = scalar_lea.vmem %s7, %s714
        %p716 = scmp.lt.s32.totalorder %s31, 1
        %s717 = scalar_select %p716, %s31, 1
        %s718 = scalar_lea.vmem %s8, %s717
        %p719 = scmp.lt.s32.totalorder %s31, 1
        %s720 = scalar_select %p719, %s31, 1
        %s721 = scalar_lea.vmem %s9, %s720
        %p722 = scmp.lt.s32.totalorder %s31, 1
        %s723 = scalar_select %p722, %s31, 1
        %s724 = scalar_lea.vmem %s10, %s723
        %p725 = scmp.lt.s32.totalorder %s31, 1
        %s726 = scalar_select %p725, %s31, 1
        %s727 = smul.addr %s726, 4
        %s728 = smul.addr %s727, 4
        %s729 = scalar_lea.vmem %s11, %s728
        %p730 = scmp.lt.s32.totalorder %s31, 1
        %s731 = scalar_select %p730, %s31, 1
        %s732 = scalar_lea.vmem %s12, %s731
        %p733 = scmp.lt.s32.totalorder %s31, 1
        %s734 = scalar_select %p733, %s31, 1
        %s735 = smul.addr %s734, 8
        %s736 = smul.addr %s735, 4
        %s737 = scalar_lea.vmem %s13, %s736
        %p738 = scmp.lt.s32.totalorder %s31, 1
        %s739 = scalar_select %p738, %s31, 1
        %s740 = scalar_lea.vmem %s14, %s739
        %p741 = scmp.lt.s32.totalorder %s31, 1
        %s742 = scalar_select %p741, %s31, 1
        %s743 = scalar_lea.vmem %s15, %s742
        %p744 = scmp.lt.s32.totalorder %s31, 1
        %s745 = scalar_select %p744, %s31, 1
        %s746 = scalar_lea.vmem %s16, %s745
        %p748 = scmp.eq.s32.totalorder %s31, 0
        // Predicated region
        $region101: #{tpu_custom_call.1} parent=87 // pred_check
          %p749 = pneg %p748
        $region102: #{tpu_custom_call.1} parent=87 // pred_check_branch
          %751 = sbr.rel (%p749) target = $region104
        $region103: #{tpu_custom_call.1} parent=87 // pred_region
          %v752 = vld [vmem:[%s0] sm:$0xff]
          %v753 = vld [vmem:[%s0 + $0x8] sm:$0xff]
          %v754 = vld [vmem:[#allocation6] sm:$0x1]
          %v755 = vld [vmem:[#allocation8] sm:$0x1]
          %vm756 = vcmask 261120
          %v757 = vsel %vm756, %v752, 0.0
          %758 = vadd.xlane.f32.xlu0 %v757
          %v759 = vpop.xlane.xlu0 %758
          %v760 = vsel %vm756, %v753, 0.0
          %761 = vadd.xlane.f32.xlu0 %v760
          %v762 = vpop.xlane.xlu0 %761
          %v763 = vrcp.pop 32.0
          %v764 = vmul.f32 %v759, %v763
          %v765 = vmul.f32 %v762, %v763
          %v766 = vsub.f32 %v752, %v764
          %v767 = vsub.f32 %v753, %v765
          %v768 = vmul.f32 %v766, %v766
          %v769 = vmul.f32 %v767, %v767
          %v770 = vsel %vm756, %v768, 0.0
          %771 = vadd.xlane.f32.xlu0 %v770
          %v772 = vpop.xlane.xlu0 %771
          %v773 = vsel %vm756, %v769, 0.0
          %774 = vadd.xlane.f32.xlu0 %v773
          %v775 = vpop.xlane.xlu0 %774
          %v776 = vmul.f32 %v772, %v763
          %v777 = vmul.f32 %v775, %v763
          %v778 = vadd.f32 %v776, 1e-07
          %v779 = vadd.f32 %v777, 1e-07
          %v780 = vrsqrt.pop %v778
          %v781 = vrsqrt.pop %v779
          %v782 = vmul.f32 %v766, %v780
          %v783 = vmul.f32 %v767, %v781
          %v785 = vlaneseq
          %v786 = vshrl.u32 %v785, 7
          %v787 = vsub.s32 0, %v786
          %v788 = vrot.slane %v754, %v787
          %v790 = vmul.f32 %v782, %v788
          %v791 = vmul.f32 %v783, %v788
          %v793 = vlaneseq
          %v794 = vshrl.u32 %v793, 7
          %v795 = vsub.s32 0, %v794
          %v796 = vrot.slane %v755, %v795
          %v798 = vadd.f32 %v790, %v796
          %v799 = vadd.f32 %v791, %v796
          %v800 = vld [vmem:[%s2] sm:$0xff]
          %v801 = vld [vmem:[%s2 + $0x8] sm:$0xff]
          %803 = vset.pattern.permute.xlu0 0
          %804 = vperm.xlu0 %803, %v800
          %v805 = vpop.permute.xlu0 %804
          %808 = vset.pattern.permute.xlu0 0
          %809 = vperm.xlu0 %808, %v801
          %v810 = vpop.permute.xlu0 %809
          %v812 = vmul.f32 %v798, %v805
          %v813 = vmul.f32 %v799, %v810
          %814 = vst.msk [vmem:[#allocation2] sm:$0xff] %vm756, %v812
          %815 = vst.msk [vmem:[#allocation2 + $0x8] sm:$0xff] %vm756, %v813
        $region104: #{tpu_custom_call.1} parent=87 // pred_fallthru
          _
        %v816 = vld [vmem:[#allocation2] sm:$0xff]
        %v817 = vld [vmem:[#allocation2 + $0x8] sm:$0xff]
        %v818 = vld [vmem:[#allocation3] sm:$0xff]
        %v819 = vld [vmem:[#allocation3 + $0x8] sm:$0xff]
        %v820 = vpack.c.bf16 %v817, %v816
        %v821 = vld [vmem:[%s707] sm:$0xf]
        %v822 = vld [vmem:[%s707 + $0x4] sm:$0xf]
        %v823 = vld [vmem:[%s707 + $0x8] sm:$0xf]
        %v824 = vld [vmem:[%s707 + $0xc] sm:$0xf]
        %v825 = vld [vmem:[%s710] sm:$0x1]
        %v827 = vlaneseq
        %v828 = vshrl.u32 %v827, 7
        %v829 = vsub.s32 0, %v828
        %v830 = vrot.slane %v825, %v829
        %v836 = vunpack.c.l.b16 %v821
        %v837 = vunpack.c.l.b16 %v822
        %v838 = vunpack.c.l.b16 %v823
        %v839 = vunpack.c.l.b16 %v824
        %v840 = vpack.c.b16 %v837, %v836
        %v841 = vpack.c.b16 %v839, %v838
        %vm844 = vcmask 261120
        %v846 = vsel %vm844, %v820, 0
        %848 = vmatprep.subr.bf16.mxu0 0
        %849 = vmatpush1.bf16.msra.mxu0 %v840
        %850 = vmatprep.subr.bf16.mxu0 0
        %851 = vmatpush1.bf16.msra.mxu0 %v841
        %852 = vmatprep.subr.bf16.mxu0 0
        %853 = vmatpush1.bf16.msra.mxu0 0
        %854 = vmatprep.subr.bf16.mxu0 0
        %855 = vmatpush1.bf16.msra.mxu0 0
        %856 = vmatprep.subr.bf16.mxu0 0
        %857 = vmatpush1.bf16.msra.mxu0 0
        %858 = vmatprep.subr.bf16.mxu0 0
        %859 = vmatpush1.bf16.msra.mxu0 0
        %860 = vmatprep.subr.bf16.mxu0 0
        %861 = vmatpush1.bf16.msra.mxu0 0
        %862 = vmatprep.subr.bf16.mxu0 0
        %863 = vmatpush1.bf16.msra.mxu0 0
        %864 = vmatprep.subr.bf16.mxu0 0
        %865 = vmatpush1.bf16.msra.mxu0 0
        %866 = vmatprep.subr.bf16.mxu0 0
        %867 = vmatpush1.bf16.msra.mxu0 0
        %868 = vmatprep.subr.bf16.mxu0 0
        %869 = vmatpush1.bf16.msra.mxu0 0
        %870 = vmatprep.subr.bf16.mxu0 0
        %871 = vmatpush1.bf16.msra.mxu0 0
        %872 = vmatprep.subr.bf16.mxu0 0
        %873 = vmatpush1.bf16.msra.mxu0 0
        %874 = vmatprep.subr.bf16.mxu0 0
        %875 = vmatpush1.bf16.msra.mxu0 0
        %876 = vmatprep.subr.bf16.mxu0 0
        %877 = vmatpush1.bf16.msra.mxu0 0
        %878 = vmatprep.subr.bf16.mxu0 0
        %879 = vmatpush1.bf16.msra.mxu0 0
        %880 = vmatprep.mubr.bf16.mxu0 0
        %881 = vmatmul.mubr.bf16.gmra.mrb[0].mxu0 %v846
        %v882 = vpop.f32.mrb[0].mxu0
        %v883 = vadd.f32 %v830, %v882
        %v884 = vpop.f32.mrb[0].mxu0
        %v885 = vpop.f32.mrb[0].mxu0
        %v886 = vadd.f32 %v830, %v885
        %v887 = vpop.f32.mrb[0].mxu0
        %888 = vdwg.mxu0
        %v889 = vmul.f32 %v883, 0.35355338
        %v890 = vmul.f32 %v886, 0.35355338
        %v891 = vld [vmem:[%s715] sm:$0xf]
        %v892 = vld [vmem:[%s715 + $0x4] sm:$0xf]
        %v893 = vld [vmem:[%s715 + $0x8] sm:$0xf]
        %v894 = vld [vmem:[%s715 + $0xc] sm:$0xf]
        %897 = vrot.lane.b32.xlu0 %v883, 96
        %v898 = vpop.permute.xlu0 %897
        %899 = vrot.lane.b32.xlu0 %v886, 96
        %v900 = vpop.permute.xlu0 %899
        %vm901 = vcmask 64512
        %v903 = vsel %vm901, %v889, 0
        %v906 = vsel %vm901, %v890, 0
        %v908 = vsel %vm901, %v898, 0
        %v910 = vsel %vm901, %v900, 0
        %912 = vmatprep.subr.mxu0 0.0
        %913 = vmatpush1.xpose.msra.mxu0 %v908
        %914 = vmatprep.subr.mxu0 0.0
        %915 = vmatpush1.xpose.msra.mxu0 %v910
        %916 = vmatprep.subr.mxu0 0.0
        %917 = vmatpush1.xpose.msra.mxu0 0.0
        %918 = vmatprep.subr.mxu0 0.0
        %919 = vmatpush1.xpose.msra.mxu0 0.0
        %920 = vmatprep.subr.mxu0 0.0
        %921 = vmatpush1.xpose.msra.mxu0 0.0
        %922 = vmatprep.subr.mxu0 0.0
        %923 = vmatpush1.xpose.msra.mxu0 0.0
        %924 = vmatprep.subr.mxu0 0.0
        %925 = vmatpush1.xpose.msra.mxu0 0.0
        %926 = vmatprep.subr.mxu0 0.0
        %927 = vmatpush1.xpose.msra.mxu0 0.0
        %928 = vmatprep.subr.mxu0 0.0
        %929 = vmatpush1.xpose.msra.mxu0 0.0
        %930 = vmatprep.subr.mxu0 0.0
        %931 = vmatpush1.xpose.msra.mxu0 0.0
        %932 = vmatprep.subr.mxu0 0.0
        %933 = vmatpush1.xpose.msra.mxu0 0.0
        %934 = vmatprep.subr.mxu0 0.0
        %935 = vmatpush1.xpose.msra.mxu0 0.0
        %936 = vmatprep.subr.mxu0 0.0
        %937 = vmatpush1.xpose.msra.mxu0 0.0
        %938 = vmatprep.subr.mxu0 0.0
        %939 = vmatpush1.xpose.msra.mxu0 0.0
        %940 = vmatprep.subr.mxu0 0.0
        %941 = vmatpush1.xpose.msra.mxu0 0.0
        %942 = vmatprep.subr.mxu0 0.0
        %943 = vmatpush1.xpose.msra.mxu0 0.0
        %944 = vmatprep.subr.mxu0 0.0
        %945 = vmatpush1.xpose.msra.mxu0 0.0
        %946 = vmatprep.subr.mxu0 0.0
        %947 = vmatpush1.xpose.msra.mxu0 0.0
        %948 = vmatprep.subr.mxu0 0.0
        %949 = vmatpush1.xpose.msra.mxu0 0.0
        %950 = vmatprep.subr.mxu0 0.0
        %951 = vmatpush1.xpose.msra.mxu0 0.0
        %952 = vmatprep.subr.mxu0 0.0
        %953 = vmatpush1.xpose.msra.mxu0 0.0
        %954 = vmatprep.subr.mxu0 0.0
        %955 = vmatpush1.xpose.msra.mxu0 0.0
        %956 = vmatprep.subr.mxu0 0.0
        %957 = vmatpush1.xpose.msra.mxu0 0.0
        %958 = vmatprep.subr.mxu0 0.0
        %959 = vmatpush1.xpose.msra.mxu0 0.0
        %960 = vmatprep.subr.mxu0 0.0
        %961 = vmatpush1.xpose.msra.mxu0 0.0
        %962 = vmatprep.subr.mxu0 0.0
        %963 = vmatpush1.xpose.msra.mxu0 0.0
        %964 = vmatprep.subr.mxu0 0.0
        %965 = vmatpush1.xpose.msra.mxu0 0.0
        %966 = vmatprep.subr.mxu0 0.0
        %967 = vmatpush1.xpose.msra.mxu0 0.0
        %968 = vmatprep.subr.mxu0 0.0
        %969 = vmatpush1.xpose.msra.mxu0 0.0
        %970 = vmatprep.subr.mxu0 0.0
        %971 = vmatpush1.xpose.msra.mxu0 0.0
        %972 = vmatprep.subr.mxu0 0.0
        %973 = vmatpush1.xpose.msra.mxu0 0.0
        %974 = vmatprep.subr.mxu0 0.0
        %975 = vmatpush1.xpose.msra.mxu0 0.0
        %976 = vmatprep.mubr.f32.mxu0 0.0
        %977 = vmatmul.mubr.f32.gmra.mrb[0].mxu0 %v903
        %v978 = vpop.f32.mrb[0].mxu0
        %v979 = vadd.f32 %v818, %v978
        %v980 = vpop.f32.mrb[0].mxu0
        %981 = vmatprep.mubr.f32.mxu0 0.0
        %982 = vmatmul.mubr.f32.gmra.mrb[0].mxu0 %v906
        %v983 = vpop.f32.mrb[0].mxu0
        %v984 = vadd.f32 %v819, %v983
        %v985 = vpop.f32.mrb[0].mxu0
        %986 = vdwg.mxu0
        %vm987 = vcmask 130048
        %v988 = vsel %vm987, %v979, -inf
        %989 = vmax.xlane.f32.xlu0 %v988
        %v990 = vpop.xlane.xlu0 %989
        %v991 = vsel %vm987, %v984, -inf
        %992 = vmax.xlane.f32.xlu0 %v991
        %v993 = vpop.xlane.xlu0 %992
        %v994 = vsub.f32 %v979, %v990
        %v995 = vsub.f32 %v984, %v993
        %v996 = vmul.f32 %v994, 1.442695
        %v997 = vpow.pop %v996
        %v998 = vmul.f32 %v995, 1.442695
        %v999 = vpow.pop %v998
        %v1000 = vsel %vm987, %v997, 0.0
        %1001 = vadd.xlane.f32.xlu0 %v1000
        %v1002 = vpop.xlane.xlu0 %1001
        %v1003 = vsel %vm987, %v999, 0.0
        %1004 = vadd.xlane.f32.xlu0 %v1003
        %v1005 = vpop.xlane.xlu0 %1004
        %v1006 = vrcp.pop %v1002
        %v1007 = vrcp.pop %v1005
        %v1008 = vmul.f32 %v997, %v1006
        %v1009 = vmul.f32 %v999, %v1007
        %1010 = vrot.lane.b32.xlu0 %v883, 64
        %v1011 = vpop.permute.xlu0 %1010
        %1012 = vrot.lane.b32.xlu0 %v886, 64
        %v1013 = vpop.permute.xlu0 %1012
        %v1017 = vsel %vm987, %v1008, 0
        %v1020 = vsel %vm987, %v1009, 0
        %1022 = vmatprep.subr.mxu0 0.0
        %1023 = vmatpush1.msra.mxu0 %v1011
        %1024 = vmatprep.subr.mxu0 0.0
        %1025 = vmatpush1.msra.mxu0 %v1013
        %1026 = vmatprep.subr.mxu0 0.0
        %1027 = vmatpush1.msra.mxu0 0.0
        %1028 = vmatprep.subr.mxu0 0.0
        %1029 = vmatpush1.msra.mxu0 0.0
        %1030 = vmatprep.subr.mxu0 0.0
        %1031 = vmatpush1.msra.mxu0 0.0
        %1032 = vmatprep.subr.mxu0 0.0
        %1033 = vmatpush1.msra.mxu0 0.0
        %1034 = vmatprep.subr.mxu0 0.0
        %1035 = vmatpush1.msra.mxu0 0.0
        %1036 = vmatprep.subr.mxu0 0.0
        %1037 = vmatpush1.msra.mxu0 0.0
        %1038 = vmatprep.subr.mxu0 0.0
        %1039 = vmatpush1.msra.mxu0 0.0
        %1040 = vmatprep.subr.mxu0 0.0
        %1041 = vmatpush1.msra.mxu0 0.0
        %1042 = vmatprep.subr.mxu0 0.0
        %1043 = vmatpush1.msra.mxu0 0.0
        %1044 = vmatprep.subr.mxu0 0.0
        %1045 = vmatpush1.msra.mxu0 0.0
        %1046 = vmatprep.subr.mxu0 0.0
        %1047 = vmatpush1.msra.mxu0 0.0
        %1048 = vmatprep.subr.mxu0 0.0
        %1049 = vmatpush1.msra.mxu0 0.0
        %1050 = vmatprep.subr.mxu0 0.0
        %1051 = vmatpush1.msra.mxu0 0.0
        %1052 = vmatprep.subr.mxu0 0.0
        %1053 = vmatpush1.msra.mxu0 0.0
        %1054 = vmatprep.subr.mxu0 0.0
        %1055 = vmatpush1.msra.mxu0 0.0
        %1056 = vmatprep.subr.mxu0 0.0
        %1057 = vmatpush1.msra.mxu0 0.0
        %1058 = vmatprep.subr.mxu0 0.0
        %1059 = vmatpush1.msra.mxu0 0.0
        %1060 = vmatprep.subr.mxu0 0.0
        %1061 = vmatpush1.msra.mxu0 0.0
        %1062 = vmatprep.subr.mxu0 0.0
        %1063 = vmatpush1.msra.mxu0 0.0
        %1064 = vmatprep.subr.mxu0 0.0
        %1065 = vmatpush1.msra.mxu0 0.0
        %1066 = vmatprep.subr.mxu0 0.0
        %1067 = vmatpush1.msra.mxu0 0.0
        %1068 = vmatprep.subr.mxu0 0.0
        %1069 = vmatpush1.msra.mxu0 0.0
        %1070 = vmatprep.subr.mxu0 0.0
        %1071 = vmatpush1.msra.mxu0 0.0
        %1072 = vmatprep.subr.mxu0 0.0
        %1073 = vmatpush1.msra.mxu0 0.0
        %1074 = vmatprep.subr.mxu0 0.0
        %1075 = vmatpush1.msra.mxu0 0.0
        %1076 = vmatprep.subr.mxu0 0.0
        %1077 = vmatpush1.msra.mxu0 0.0
        %1078 = vmatprep.subr.mxu0 0.0
        %1079 = vmatpush1.msra.mxu0 0.0
        %1080 = vmatprep.subr.mxu0 0.0
        %1081 = vmatpush1.msra.mxu0 0.0
        %1082 = vmatprep.subr.mxu0 0.0
        %1083 = vmatpush1.msra.mxu0 0.0
        %1084 = vmatprep.subr.mxu0 0.0
        %1085 = vmatpush1.msra.mxu0 0.0
        %1086 = vmatprep.mubr.f32.mxu0 0.0
        %1087 = vmatmul.mubr.f32.gmra.mrb[0].mxu0 %v1017
        %v1088 = vpop.f32.mrb[0].mxu0
        %v1089 = vadd.f32 0.0, %v1088
        %v1090 = vpop.f32.mrb[0].mxu0
        %1091 = vmatprep.mubr.f32.mxu0 0.0
        %1092 = vmatmul.mubr.f32.gmra.mrb[0].mxu0 %v1020
        %v1093 = vpop.f32.mrb[0].mxu0
        %v1094 = vadd.f32 0.0, %v1093
        %v1095 = vpop.f32.mrb[0].mxu0
        %1096 = vdwg.mxu0
        %v1097 = vpack.c.bf16 %v1094, %v1089
        %1098 = vrot.lane.b32.xlu0 %v889, 120
        %v1099 = vpop.permute.xlu0 %1098
        %1100 = vrot.lane.b32.xlu0 %v890, 120
        %v1101 = vpop.permute.xlu0 %1100
        %1102 = vrot.lane.b32.xlu0 %v883, 88
        %v1103 = vpop.permute.xlu0 %1102
        %1104 = vrot.lane.b32.xlu0 %v886, 88
        %v1105 = vpop.permute.xlu0 %1104
        %v1106 = vsel %vm901, %v1099, 0
        %v1108 = vsel %vm901, %v1101, 0
        %v1110 = vsel %vm901, %v1103, 0
        %v1112 = vsel %vm901, %v1105, 0
        %1114 = vmatprep.subr.mxu0 0.0
        %1115 = vmatpush1.xpose.msra.mxu0 %v1110
        %1116 = vmatprep.subr.mxu0 0.0
        %1117 = vmatpush1.xpose.msra.mxu0 %v1112
        %1118 = vmatprep.subr.mxu0 0.0
        %1119 = vmatpush1.xpose.msra.mxu0 0.0
        %1120 = vmatprep.subr.mxu0 0.0
        %1121 = vmatpush1.xpose.msra.mxu0 0.0
        %1122 = vmatprep.subr.mxu0 0.0
        %1123 = vmatpush1.xpose.msra.mxu0 0.0
        %1124 = vmatprep.subr.mxu0 0.0
        %1125 = vmatpush1.xpose.msra.mxu0 0.0
        %1126 = vmatprep.subr.mxu0 0.0
        %1127 = vmatpush1.xpose.msra.mxu0 0.0
        %1128 = vmatprep.subr.mxu0 0.0
        %1129 = vmatpush1.xpose.msra.mxu0 0.0
        %1130 = vmatprep.subr.mxu0 0.0
        %1131 = vmatpush1.xpose.msra.mxu0 0.0
        %1132 = vmatprep.subr.mxu0 0.0
        %1133 = vmatpush1.xpose.msra.mxu0 0.0
        %1134 = vmatprep.subr.mxu0 0.0
        %1135 = vmatpush1.xpose.msra.mxu0 0.0
        %1136 = vmatprep.subr.mxu0 0.0
        %1137 = vmatpush1.xpose.msra.mxu0 0.0
        %1138 = vmatprep.subr.mxu0 0.0
        %1139 = vmatpush1.xpose.msra.mxu0 0.0
        %1140 = vmatprep.subr.mxu0 0.0
        %1141 = vmatpush1.xpose.msra.mxu0 0.0
        %1142 = vmatprep.subr.mxu0 0.0
        %1143 = vmatpush1.xpose.msra.mxu0 0.0
        %1144 = vmatprep.subr.mxu0 0.0
        %1145 = vmatpush1.xpose.msra.mxu0 0.0
        %1146 = vmatprep.subr.mxu0 0.0
        %1147 = vmatpush1.xpose.msra.mxu0 0.0
        %1148 = vmatprep.subr.mxu0 0.0
        %1149 = vmatpush1.xpose.msra.mxu0 0.0
        %1150 = vmatprep.subr.mxu0 0.0
        %1151 = vmatpush1.xpose.msra.mxu0 0.0
        %1152 = vmatprep.subr.mxu0 0.0
        %1153 = vmatpush1.xpose.msra.mxu0 0.0
        %1154 = vmatprep.subr.mxu0 0.0
        %1155 = vmatpush1.xpose.msra.mxu0 0.0
        %1156 = vmatprep.subr.mxu0 0.0
        %1157 = vmatpush1.xpose.msra.mxu0 0.0
        %1158 = vmatprep.subr.mxu0 0.0
        %1159 = vmatpush1.xpose.msra.mxu0 0.0
        %1160 = vmatprep.subr.mxu0 0.0
        %1161 = vmatpush1.xpose.msra.mxu0 0.0
        %1162 = vmatprep.subr.mxu0 0.0
        %1163 = vmatpush1.xpose.msra.mxu0 0.0
        %1164 = vmatprep.subr.mxu0 0.0
        %1165 = vmatpush1.xpose.msra.mxu0 0.0
        %1166 = vmatprep.subr.mxu0 0.0
        %1167 = vmatpush1.xpose.msra.mxu0 0.0
        %1168 = vmatprep.subr.mxu0 0.0
        %1169 = vmatpush1.xpose.msra.mxu0 0.0
        %1170 = vmatprep.subr.mxu0 0.0
        %1171 = vmatpush1.xpose.msra.mxu0 0.0
        %1172 = vmatprep.subr.mxu0 0.0
        %1173 = vmatpush1.xpose.msra.mxu0 0.0
        %1174 = vmatprep.subr.mxu0 0.0
        %1175 = vmatpush1.xpose.msra.mxu0 0.0
        %1176 = vmatprep.subr.mxu0 0.0
        %1177 = vmatpush1.xpose.msra.mxu0 0.0
        %1178 = vmatprep.mubr.f32.mxu0 0.0
        %1179 = vmatmul.mubr.f32.gmra.mrb[0].mxu0 %v1106
        %v1180 = vpop.f32.mrb[0].mxu0
        %v1181 = vadd.f32 %v818, %v1180
        %v1182 = vpop.f32.mrb[0].mxu0
        %1183 = vmatprep.mubr.f32.mxu0 0.0
        %1184 = vmatmul.mubr.f32.gmra.mrb[0].mxu0 %v1108
        %v1185 = vpop.f32.mrb[0].mxu0
        %v1186 = vadd.f32 %v819, %v1185
        %v1187 = vpop.f32.mrb[0].mxu0
        %1188 = vdwg.mxu0
        %v1189 = vsel %vm987, %v1181, -inf
        %1190 = vmax.xlane.f32.xlu0 %v1189
        %v1191 = vpop.xlane.xlu0 %1190
        %v1192 = vsel %vm987, %v1186, -inf
        %1193 = vmax.xlane.f32.xlu0 %v1192
        %v1194 = vpop.xlane.xlu0 %1193
        %v1195 = vsub.f32 %v1181, %v1191
        %v1196 = vsub.f32 %v1186, %v1194
        %v1197 = vmul.f32 %v1195, 1.442695
        %v1198 = vpow.pop %v1197
        %v1199 = vmul.f32 %v1196, 1.442695
        %v1200 = vpow.pop %v1199
        %v1201 = vsel %vm987, %v1198, 0.0
        %1202 = vadd.xlane.f32.xlu0 %v1201
        %v1203 = vpop.xlane.xlu0 %1202
        %v1204 = vsel %vm987, %v1200, 0.0
        %1205 = vadd.xlane.f32.xlu0 %v1204
        %v1206 = vpop.xlane.xlu0 %1205
        %v1207 = vrcp.pop %v1203
        %v1208 = vrcp.pop %v1206
        %v1209 = vmul.f32 %v1198, %v1207
        %v1210 = vmul.f32 %v1200, %v1208
        %1211 = vrot.lane.b32.xlu0 %v883, 56
        %v1212 = vpop.permute.xlu0 %1211
        %1213 = vrot.lane.b32.xlu0 %v886, 56
        %v1214 = vpop.permute.xlu0 %1213
        %v1218 = vsel %vm987, %v1209, 0
        %v1221 = vsel %vm987, %v1210, 0
        %1223 = vmatprep.subr.mxu0 0.0
        %1224 = vmatpush1.msra.mxu0 %v1212
        %1225 = vmatprep.subr.mxu0 0.0
        %1226 = vmatpush1.msra.mxu0 %v1214
        %1227 = vmatprep.subr.mxu0 0.0
        %1228 = vmatpush1.msra.mxu0 0.0
        %1229 = vmatprep.subr.mxu0 0.0
        %1230 = vmatpush1.msra.mxu0 0.0
        %1231 = vmatprep.subr.mxu0 0.0
        %1232 = vmatpush1.msra.mxu0 0.0
        %1233 = vmatprep.subr.mxu0 0.0
        %1234 = vmatpush1.msra.mxu0 0.0
        %1235 = vmatprep.subr.mxu0 0.0
        %1236 = vmatpush1.msra.mxu0 0.0
        %1237 = vmatprep.subr.mxu0 0.0
        %1238 = vmatpush1.msra.mxu0 0.0
        %1239 = vmatprep.subr.mxu0 0.0
        %1240 = vmatpush1.msra.mxu0 0.0
        %1241 = vmatprep.subr.mxu0 0.0
        %1242 = vmatpush1.msra.mxu0 0.0
        %1243 = vmatprep.subr.mxu0 0.0
        %1244 = vmatpush1.msra.mxu0 0.0
        %1245 = vmatprep.subr.mxu0 0.0
        %1246 = vmatpush1.msra.mxu0 0.0
        %1247 = vmatprep.subr.mxu0 0.0
        %1248 = vmatpush1.msra.mxu0 0.0
        %1249 = vmatprep.subr.mxu0 0.0
        %1250 = vmatpush1.msra.mxu0 0.0
        %1251 = vmatprep.subr.mxu0 0.0
        %1252 = vmatpush1.msra.mxu0 0.0
        %1253 = vmatprep.subr.mxu0 0.0
        %1254 = vmatpush1.msra.mxu0 0.0
        %1255 = vmatprep.subr.mxu0 0.0
        %1256 = vmatpush1.msra.mxu0 0.0
        %1257 = vmatprep.subr.mxu0 0.0
        %1258 = vmatpush1.msra.mxu0 0.0
        %1259 = vmatprep.subr.mxu0 0.0
        %1260 = vmatpush1.msra.mxu0 0.0
        %1261 = vmatprep.subr.mxu0 0.0
        %1262 = vmatpush1.msra.mxu0 0.0
        %1263 = vmatprep.subr.mxu0 0.0
        %1264 = vmatpush1.msra.mxu0 0.0
        %1265 = vmatprep.subr.mxu0 0.0
        %1266 = vmatpush1.msra.mxu0 0.0
        %1267 = vmatprep.subr.mxu0 0.0
        %1268 = vmatpush1.msra.mxu0 0.0
        %1269 = vmatprep.subr.mxu0 0.0
        %1270 = vmatpush1.msra.mxu0 0.0
        %1271 = vmatprep.subr.mxu0 0.0
        %1272 = vmatpush1.msra.mxu0 0.0
        %1273 = vmatprep.subr.mxu0 0.0
        %1274 = vmatpush1.msra.mxu0 0.0
        %1275 = vmatprep.subr.mxu0 0.0
        %1276 = vmatpush1.msra.mxu0 0.0
        %1277 = vmatprep.subr.mxu0 0.0
        %1278 = vmatpush1.msra.mxu0 0.0
        %1279 = vmatprep.subr.mxu0 0.0
        %1280 = vmatpush1.msra.mxu0 0.0
        %1281 = vmatprep.subr.mxu0 0.0
        %1282 = vmatpush1.msra.mxu0 0.0
        %1283 = vmatprep.subr.mxu0 0.0
        %1284 = vmatpush1.msra.mxu0 0.0
        %1285 = vmatprep.subr.mxu0 0.0
        %1286 = vmatpush1.msra.mxu0 0.0
        %1287 = vmatprep.mubr.f32.mxu0 0.0
        %1288 = vmatmul.mubr.f32.gmra.mrb[0].mxu0 %v1218
        %v1289 = vpop.f32.mrb[0].mxu0
        %v1290 = vadd.f32 0.0, %v1289
        %v1291 = vpop.f32.mrb[0].mxu0
        %1292 = vmatprep.mubr.f32.mxu0 0.0
        %1293 = vmatmul.mubr.f32.gmra.mrb[0].mxu0 %v1221
        %v1294 = vpop.f32.mrb[0].mxu0
        %v1295 = vadd.f32 0.0, %v1294
        %v1296 = vpop.f32.mrb[0].mxu0
        %1297 = vdwg.mxu0
        %v1298 = vpack.c.bf16 %v1295, %v1290
        %v1300 = vsel %vm901, %v1298, 0
        %vm1302 = vcmask 1043456
        %v1304 = vsel %vm1302, %v892, 0
        %1306 = vmatprep.subr.bf16.mxu0 0
        %1307 = vmatpush1.bf16.msra.mxu0 %v1304
        %1308 = vmatprep.subr.bf16.mxu0 0
        %1309 = vmatpush1.bf16.msra.mxu0 0
        %1310 = vmatprep.subr.bf16.mxu0 0
        %1311 = vmatpush1.bf16.msra.mxu0 0
        %1312 = vmatprep.subr.bf16.mxu0 0
        %1313 = vmatpush1.bf16.msra.mxu0 0
        %1314 = vmatprep.subr.bf16.mxu0 0
        %1315 = vmatpush1.bf16.msra.mxu0 0
        %1316 = vmatprep.subr.bf16.mxu0 0
        %1317 = vmatpush1.bf16.msra.mxu0 0
        %1318 = vmatprep.subr.bf16.mxu0 0
        %1319 = vmatpush1.bf16.msra.mxu0 0
        %1320 = vmatprep.subr.bf16.mxu0 0
        %1321 = vmatpush1.bf16.msra.mxu0 0
        %1322 = vmatprep.subr.bf16.mxu0 0
        %1323 = vmatpush1.bf16.msra.mxu0 0
        %1324 = vmatprep.subr.bf16.mxu0 0
        %1325 = vmatpush1.bf16.msra.mxu0 0
        %1326 = vmatprep.subr.bf16.mxu0 0
        %1327 = vmatpush1.bf16.msra.mxu0 0
        %1328 = vmatprep.subr.bf16.mxu0 0
        %1329 = vmatpush1.bf16.msra.mxu0 0
        %1330 = vmatprep.subr.bf16.mxu0 0
        %1331 = vmatpush1.bf16.msra.mxu0 0
        %1332 = vmatprep.subr.bf16.mxu0 0
        %1333 = vmatpush1.bf16.msra.mxu0 0
        %1334 = vmatprep.subr.bf16.mxu0 0
        %1335 = vmatpush1.bf16.msra.mxu0 0
        %1336 = vmatprep.subr.bf16.mxu0 0
        %1337 = vmatpush1.bf16.msra.mxu0 0
        %1338 = vmatprep.mubr.bf16.mxu0 0
        %1339 = vmatmul.mubr.bf16.gmra.mrb[0].mxu0 %v1300
        %v1340 = vpop.f32.mrb[0].mxu0
        %v1341 = vadd.f32 0.0, %v1340
        %v1342 = vpop.f32.mrb[0].mxu0
        %v1343 = vpop.f32.mrb[0].mxu0
        %v1344 = vadd.f32 0.0, %v1343
        %v1345 = vpop.f32.mrb[0].mxu0
        %1346 = vdwg.mxu0
        %v1348 = vsel %vm901, %v1097, 0
        %v1351 = vsel %vm1302, %v891, 0
        %1353 = vmatprep.subr.bf16.mxu0 0
        %1354 = vmatpush1.bf16.msra.mxu0 %v1351
        %1355 = vmatprep.subr.bf16.mxu0 0
        %1356 = vmatpush1.bf16.msra.mxu0 0
        %1357 = vmatprep.subr.bf16.mxu0 0
        %1358 = vmatpush1.bf16.msra.mxu0 0
        %1359 = vmatprep.subr.bf16.mxu0 0
        %1360 = vmatpush1.bf16.msra.mxu0 0
        %1361 = vmatprep.subr.bf16.mxu0 0
        %1362 = vmatpush1.bf16.msra.mxu0 0
        %1363 = vmatprep.subr.bf16.mxu0 0
        %1364 = vmatpush1.bf16.msra.mxu0 0
        %1365 = vmatprep.subr.bf16.mxu0 0
        %1366 = vmatpush1.bf16.msra.mxu0 0
        %1367 = vmatprep.subr.bf16.mxu0 0
        %1368 = vmatpush1.bf16.msra.mxu0 0
        %1369 = vmatprep.subr.bf16.mxu0 0
        %1370 = vmatpush1.bf16.msra.mxu0 0
        %1371 = vmatprep.subr.bf16.mxu0 0
        %1372 = vmatpush1.bf16.msra.mxu0 0
        %1373 = vmatprep.subr.bf16.mxu0 0
        %1374 = vmatpush1.bf16.msra.mxu0 0
        %1375 = vmatprep.subr.bf16.mxu0 0
        %1376 = vmatpush1.bf16.msra.mxu0 0
        %1377 = vmatprep.subr.bf16.mxu0 0
        %1378 = vmatpush1.bf16.msra.mxu0 0
        %1379 = vmatprep.subr.bf16.mxu0 0
        %1380 = vmatpush1.bf16.msra.mxu0 0
        %1381 = vmatprep.subr.bf16.mxu0 0
        %1382 = vmatpush1.bf16.msra.mxu0 0
        %1383 = vmatprep.subr.bf16.mxu0 0
        %1384 = vmatpush1.bf16.msra.mxu0 0
        %1385 = vmatprep.mubr.bf16.mxu0 0
        %1386 = vmatmul.mubr.bf16.gmra.mrb[0].mxu0 %v1348
        %v1387 = vpop.f32.mrb[0].mxu0
        %v1388 = vadd.f32 %v1341, %v1387
        %v1389 = vpop.f32.mrb[0].mxu0
        %v1390 = vpop.f32.mrb[0].mxu0
        %v1391 = vadd.f32 %v1344, %v1390
        %v1392 = vpop.f32.mrb[0].mxu0
        %1393 = vdwg.mxu0
        %1394 = vrot.lane.b32.xlu0 %v889, 112
        %v1395 = vpop.permute.xlu0 %1394
        %1396 = vrot.lane.b32.xlu0 %v890, 112
        %v1397 = vpop.permute.xlu0 %1396
        %1398 = vrot.lane.b32.xlu0 %v883, 80
        %v1399 = vpop.permute.xlu0 %1398
        %1400 = vrot.lane.b32.xlu0 %v886, 80
        %v1401 = vpop.permute.xlu0 %1400
        %v1402 = vsel %vm901, %v1395, 0
        %v1404 = vsel %vm901, %v1397, 0
        %v1406 = vsel %vm901, %v1399, 0
        %v1408 = vsel %vm901, %v1401, 0
        %1410 = vmatprep.subr.mxu0 0.0
        %1411 = vmatpush1.xpose.msra.mxu0 %v1406
        %1412 = vmatprep.subr.mxu0 0.0
        %1413 = vmatpush1.xpose.msra.mxu0 %v1408
        %1414 = vmatprep.subr.mxu0 0.0
        %1415 = vmatpush1.xpose.msra.mxu0 0.0
        %1416 = vmatprep.subr.mxu0 0.0
        %1417 = vmatpush1.xpose.msra.mxu0 0.0
        %1418 = vmatprep.subr.mxu0 0.0
        %1419 = vmatpush1.xpose.msra.mxu0 0.0
        %1420 = vmatprep.subr.mxu0 0.0
        %1421 = vmatpush1.xpose.msra.mxu0 0.0
        %1422 = vmatprep.subr.mxu0 0.0
        %1423 = vmatpush1.xpose.msra.mxu0 0.0
        %1424 = vmatprep.subr.mxu0 0.0
        %1425 = vmatpush1.xpose.msra.mxu0 0.0
        %1426 = vmatprep.subr.mxu0 0.0
        %1427 = vmatpush1.xpose.msra.mxu0 0.0
        %1428 = vmatprep.subr.mxu0 0.0
        %1429 = vmatpush1.xpose.msra.mxu0 0.0
        %1430 = vmatprep.subr.mxu0 0.0
        %1431 = vmatpush1.xpose.msra.mxu0 0.0
        %1432 = vmatprep.subr.mxu0 0.0
        %1433 = vmatpush1.xpose.msra.mxu0 0.0
        %1434 = vmatprep.subr.mxu0 0.0
        %1435 = vmatpush1.xpose.msra.mxu0 0.0
        %1436 = vmatprep.subr.mxu0 0.0
        %1437 = vmatpush1.xpose.msra.mxu0 0.0
        %1438 = vmatprep.subr.mxu0 0.0
        %1439 = vmatpush1.xpose.msra.mxu0 0.0
        %1440 = vmatprep.subr.mxu0 0.0
        %1441 = vmatpush1.xpose.msra.mxu0 0.0
        %1442 = vmatprep.subr.mxu0 0.0
        %1443 = vmatpush1.xpose.msra.mxu0 0.0
        %1444 = vmatprep.subr.mxu0 0.0
        %1445 = vmatpush1.xpose.msra.mxu0 0.0
        %1446 = vmatprep.subr.mxu0 0.0
        %1447 = vmatpush1.xpose.msra.mxu0 0.0
        %1448 = vmatprep.subr.mxu0 0.0
        %1449 = vmatpush1.xpose.msra.mxu0 0.0
        %1450 = vmatprep.subr.mxu0 0.0
        %1451 = vmatpush1.xpose.msra.mxu0 0.0
        %1452 = vmatprep.subr.mxu0 0.0
        %1453 = vmatpush1.xpose.msra.mxu0 0.0
        %1454 = vmatprep.subr.mxu0 0.0
        %1455 = vmatpush1.xpose.msra.mxu0 0.0
        %1456 = vmatprep.subr.mxu0 0.0
        %1457 = vmatpush1.xpose.msra.mxu0 0.0
        %1458 = vmatprep.subr.mxu0 0.0
        %1459 = vmatpush1.xpose.msra.mxu0 0.0
        %1460 = vmatprep.subr.mxu0 0.0
        %1461 = vmatpush1.xpose.msra.mxu0 0.0
        %1462 = vmatprep.subr.mxu0 0.0
        %1463 = vmatpush1.xpose.msra.mxu0 0.0
        %1464 = vmatprep.subr.mxu0 0.0
        %1465 = vmatpush1.xpose.msra.mxu0 0.0
        %1466 = vmatprep.subr.mxu0 0.0
        %1467 = vmatpush1.xpose.msra.mxu0 0.0
        %1468 = vmatprep.subr.mxu0 0.0
        %1469 = vmatpush1.xpose.msra.mxu0 0.0
        %1470 = vmatprep.subr.mxu0 0.0
        %1471 = vmatpush1.xpose.msra.mxu0 0.0
        %1472 = vmatprep.subr.mxu0 0.0
        %1473 = vmatpush1.xpose.msra.mxu0 0.0
        %1474 = vmatprep.mubr.f32.mxu0 0.0
        %1475 = vmatmul.mubr.f32.gmra.mrb[0].mxu0 %v1402
        %v1476 = vpop.f32.mrb[0].mxu0
        %v1477 = vadd.f32 %v818, %v1476
        %v1478 = vpop.f32.mrb[0].mxu0
        %1479 = vmatprep.mubr.f32.mxu0 0.0
        %1480 = vmatmul.mubr.f32.gmra.mrb[0].mxu0 %v1404
        %v1481 = vpop.f32.mrb[0].mxu0
        %v1482 = vadd.f32 %v819, %v1481
        %v1483 = vpop.f32.mrb[0].mxu0
        %1484 = vdwg.mxu0
        %v1485 = vsel %vm987, %v1477, -inf
        %1486 = vmax.xlane.f32.xlu0 %v1485
        %v1487 = vpop.xlane.xlu0 %1486
        %v1488 = vsel %vm987, %v1482, -inf
        %1489 = vmax.xlane.f32.xlu0 %v1488
        %v1490 = vpop.xlane.xlu0 %1489
        %v1491 = vsub.f32 %v1477, %v1487
        %v1492 = vsub.f32 %v1482, %v1490
        %v1493 = vmul.f32 %v1491, 1.442695
        %v1494 = vpow.pop %v1493
        %v1495 = vmul.f32 %v1492, 1.442695
        %v1496 = vpow.pop %v1495
        %v1497 = vsel %vm987, %v1494, 0.0
        %1498 = vadd.xlane.f32.xlu0 %v1497
        %v1499 = vpop.xlane.xlu0 %1498
        %v1500 = vsel %vm987, %v1496, 0.0
        %1501 = vadd.xlane.f32.xlu0 %v1500
        %v1502 = vpop.xlane.xlu0 %1501
        %v1503 = vrcp.pop %v1499
        %v1504 = vrcp.pop %v1502
        %v1505 = vmul.f32 %v1494, %v1503
        %v1506 = vmul.f32 %v1496, %v1504
        %1507 = vrot.lane.b32.xlu0 %v883, 48
        %v1508 = vpop.permute.xlu0 %1507
        %1509 = vrot.lane.b32.xlu0 %v886, 48
        %v1510 = vpop.permute.xlu0 %1509
        %v1514 = vsel %vm987, %v1505, 0
        %v1517 = vsel %vm987, %v1506, 0
        %1519 = vmatprep.subr.mxu0 0.0
        %1520 = vmatpush1.msra.mxu0 %v1508
        %1521 = vmatprep.subr.mxu0 0.0
        %1522 = vmatpush1.msra.mxu0 %v1510
        %1523 = vmatprep.subr.mxu0 0.0
        %1524 = vmatpush1.msra.mxu0 0.0
        %1525 = vmatprep.subr.mxu0 0.0
        %1526 = vmatpush1.msra.mxu0 0.0
        %1527 = vmatprep.subr.mxu0 0.0
        %1528 = vmatpush1.msra.mxu0 0.0
        %1529 = vmatprep.subr.mxu0 0.0
        %1530 = vmatpush1.msra.mxu0 0.0
        %1531 = vmatprep.subr.mxu0 0.0
        %1532 = vmatpush1.msra.mxu0 0.0
        %1533 = vmatprep.subr.mxu0 0.0
        %1534 = vmatpush1.msra.mxu0 0.0
        %1535 = vmatprep.subr.mxu0 0.0
        %1536 = vmatpush1.msra.mxu0 0.0
        %1537 = vmatprep.subr.mxu0 0.0
        %1538 = vmatpush1.msra.mxu0 0.0
        %1539 = vmatprep.subr.mxu0 0.0
        %1540 = vmatpush1.msra.mxu0 0.0
        %1541 = vmatprep.subr.mxu0 0.0
        %1542 = vmatpush1.msra.mxu0 0.0
        %1543 = vmatprep.subr.mxu0 0.0
        %1544 = vmatpush1.msra.mxu0 0.0
        %1545 = vmatprep.subr.mxu0 0.0
        %1546 = vmatpush1.msra.mxu0 0.0
        %1547 = vmatprep.subr.mxu0 0.0
        %1548 = vmatpush1.msra.mxu0 0.0
        %1549 = vmatprep.subr.mxu0 0.0
        %1550 = vmatpush1.msra.mxu0 0.0
        %1551 = vmatprep.subr.mxu0 0.0
        %1552 = vmatpush1.msra.mxu0 0.0
        %1553 = vmatprep.subr.mxu0 0.0
        %1554 = vmatpush1.msra.mxu0 0.0
        %1555 = vmatprep.subr.mxu0 0.0
        %1556 = vmatpush1.msra.mxu0 0.0
        %1557 = vmatprep.subr.mxu0 0.0
        %1558 = vmatpush1.msra.mxu0 0.0
        %1559 = vmatprep.subr.mxu0 0.0
        %1560 = vmatpush1.msra.mxu0 0.0
        %1561 = vmatprep.subr.mxu0 0.0
        %1562 = vmatpush1.msra.mxu0 0.0
        %1563 = vmatprep.subr.mxu0 0.0
        %1564 = vmatpush1.msra.mxu0 0.0
        %1565 = vmatprep.subr.mxu0 0.0
        %1566 = vmatpush1.msra.mxu0 0.0
        %1567 = vmatprep.subr.mxu0 0.0
        %1568 = vmatpush1.msra.mxu0 0.0
        %1569 = vmatprep.subr.mxu0 0.0
        %1570 = vmatpush1.msra.mxu0 0.0
        %1571 = vmatprep.subr.mxu0 0.0
        %1572 = vmatpush1.msra.mxu0 0.0
        %1573 = vmatprep.subr.mxu0 0.0
        %1574 = vmatpush1.msra.mxu0 0.0
        %1575 = vmatprep.subr.mxu0 0.0
        %1576 = vmatpush1.msra.mxu0 0.0
        %1577 = vmatprep.subr.mxu0 0.0
        %1578 = vmatpush1.msra.mxu0 0.0
        %1579 = vmatprep.subr.mxu0 0.0
        %1580 = vmatpush1.msra.mxu0 0.0
        %1581 = vmatprep.subr.mxu0 0.0
        %1582 = vmatpush1.msra.mxu0 0.0
        %1583 = vmatprep.mubr.f32.mxu0 0.0
        %1584 = vmatmul.mubr.f32.gmra.mrb[0].mxu0 %v1514
        %v1585 = vpop.f32.mrb[0].mxu0
        %v1586 = vadd.f32 0.0, %v1585
        %v1587 = vpop.f32.mrb[0].mxu0
        %1588 = vmatprep.mubr.f32.mxu0 0.0
        %1589 = vmatmul.mubr.f32.gmra.mrb[0].mxu0 %v1517
        %v1590 = vpop.f32.mrb[0].mxu0
        %v1591 = vadd.f32 0.0, %v1590
        %v1592 = vpop.f32.mrb[0].mxu0
        %1593 = vdwg.mxu0
        %v1594 = vpack.c.bf16 %v1591, %v1586
        %v1596 = vsel %vm901, %v1594, 0
        %v1599 = vsel %vm1302, %v893, 0
        %1601 = vmatprep.subr.bf16.mxu0 0
        %1602 = vmatpush1.bf16.msra.mxu0 %v1599
        %1603 = vmatprep.subr.bf16.mxu0 0
        %1604 = vmatpush1.bf16.msra.mxu0 0
        %1605 = vmatprep.subr.bf16.mxu0 0
        %1606 = vmatpush1.bf16.msra.mxu0 0
        %1607 = vmatprep.subr.bf16.mxu0 0
        %1608 = vmatpush1.bf16.msra.mxu0 0
        %1609 = vmatprep.subr.bf16.mxu0 0
        %1610 = vmatpush1.bf16.msra.mxu0 0
        %1611 = vmatprep.subr.bf16.mxu0 0
        %1612 = vmatpush1.bf16.msra.mxu0 0
        %1613 = vmatprep.subr.bf16.mxu0 0
        %1614 = vmatpush1.bf16.msra.mxu0 0
        %1615 = vmatprep.subr.bf16.mxu0 0
        %1616 = vmatpush1.bf16.msra.mxu0 0
        %1617 = vmatprep.subr.bf16.mxu0 0
        %1618 = vmatpush1.bf16.msra.mxu0 0
        %1619 = vmatprep.subr.bf16.mxu0 0
        %1620 = vmatpush1.bf16.msra.mxu0 0
        %1621 = vmatprep.subr.bf16.mxu0 0
        %1622 = vmatpush1.bf16.msra.mxu0 0
        %1623 = vmatprep.subr.bf16.mxu0 0
        %1624 = vmatpush1.bf16.msra.mxu0 0
        %1625 = vmatprep.subr.bf16.mxu0 0
        %1626 = vmatpush1.bf16.msra.mxu0 0
        %1627 = vmatprep.subr.bf16.mxu0 0
        %1628 = vmatpush1.bf16.msra.mxu0 0
        %1629 = vmatprep.subr.bf16.mxu0 0
        %1630 = vmatpush1.bf16.msra.mxu0 0
        %1631 = vmatprep.subr.bf16.mxu0 0
        %1632 = vmatpush1.bf16.msra.mxu0 0
        %1633 = vmatprep.mubr.bf16.mxu0 0
        %1634 = vmatmul.mubr.bf16.gmra.mrb[0].mxu0 %v1596
        %v1635 = vpop.f32.mrb[0].mxu0
        %v1636 = vadd.f32 0.0, %v1635
        %v1637 = vpop.f32.mrb[0].mxu0
        %v1638 = vpop.f32.mrb[0].mxu0
        %v1639 = vadd.f32 0.0, %v1638
        %v1640 = vpop.f32.mrb[0].mxu0
        %1641 = vdwg.mxu0
        %v1642 = vadd.f32 %v1388, %v1636
        %v1643 = vadd.f32 %v1391, %v1639
        %1644 = vrot.lane.b32.xlu0 %v889, 104
        %v1645 = vpop.permute.xlu0 %1644
        %1646 = vrot.lane.b32.xlu0 %v890, 104
        %v1647 = vpop.permute.xlu0 %1646
        %1648 = vrot.lane.b32.xlu0 %v883, 72
        %v1649 = vpop.permute.xlu0 %1648
        %1650 = vrot.lane.b32.xlu0 %v886, 72
        %v1651 = vpop.permute.xlu0 %1650
        %v1652 = vsel %vm901, %v1645, 0
        %v1654 = vsel %vm901, %v1647, 0
        %v1656 = vsel %vm901, %v1649, 0
        %v1658 = vsel %vm901, %v1651, 0
        %1660 = vmatprep.subr.mxu0 0.0
        %1661 = vmatpush1.xpose.msra.mxu0 %v1656
        %1662 = vmatprep.subr.mxu0 0.0
        %1663 = vmatpush1.xpose.msra.mxu0 %v1658
        %1664 = vmatprep.subr.mxu0 0.0
        %1665 = vmatpush1.xpose.msra.mxu0 0.0
        %1666 = vmatprep.subr.mxu0 0.0
        %1667 = vmatpush1.xpose.msra.mxu0 0.0
        %1668 = vmatprep.subr.mxu0 0.0
        %1669 = vmatpush1.xpose.msra.mxu0 0.0
        %1670 = vmatprep.subr.mxu0 0.0
        %1671 = vmatpush1.xpose.msra.mxu0 0.0
        %1672 = vmatprep.subr.mxu0 0.0
        %1673 = vmatpush1.xpose.msra.mxu0 0.0
        %1674 = vmatprep.subr.mxu0 0.0
        %1675 = vmatpush1.xpose.msra.mxu0 0.0
        %1676 = vmatprep.subr.mxu0 0.0
        %1677 = vmatpush1.xpose.msra.mxu0 0.0
        %1678 = vmatprep.subr.mxu0 0.0
        %1679 = vmatpush1.xpose.msra.mxu0 0.0
        %1680 = vmatprep.subr.mxu0 0.0
        %1681 = vmatpush1.xpose.msra.mxu0 0.0
        %1682 = vmatprep.subr.mxu0 0.0
        %1683 = vmatpush1.xpose.msra.mxu0 0.0
        %1684 = vmatprep.subr.mxu0 0.0
        %1685 = vmatpush1.xpose.msra.mxu0 0.0
        %1686 = vmatprep.subr.mxu0 0.0
        %1687 = vmatpush1.xpose.msra.mxu0 0.0
        %1688 = vmatprep.subr.mxu0 0.0
        %1689 = vmatpush1.xpose.msra.mxu0 0.0
        %1690 = vmatprep.subr.mxu0 0.0
        %1691 = vmatpush1.xpose.msra.mxu0 0.0
        %1692 = vmatprep.subr.mxu0 0.0
        %1693 = vmatpush1.xpose.msra.mxu0 0.0
        %1694 = vmatprep.subr.mxu0 0.0
        %1695 = vmatpush1.xpose.msra.mxu0 0.0
        %1696 = vmatprep.subr.mxu0 0.0
        %1697 = vmatpush1.xpose.msra.mxu0 0.0
        %1698 = vmatprep.subr.mxu0 0.0
        %1699 = vmatpush1.xpose.msra.mxu0 0.0
        %1700 = vmatprep.subr.mxu0 0.0
        %1701 = vmatpush1.xpose.msra.mxu0 0.0
        %1702 = vmatprep.subr.mxu0 0.0
        %1703 = vmatpush1.xpose.msra.mxu0 0.0
        %1704 = vmatprep.subr.mxu0 0.0
        %1705 = vmatpush1.xpose.msra.mxu0 0.0
        %1706 = vmatprep.subr.mxu0 0.0
        %1707 = vmatpush1.xpose.msra.mxu0 0.0
        %1708 = vmatprep.subr.mxu0 0.0
        %1709 = vmatpush1.xpose.msra.mxu0 0.0
        %1710 = vmatprep.subr.mxu0 0.0
        %1711 = vmatpush1.xpose.msra.mxu0 0.0
        %1712 = vmatprep.subr.mxu0 0.0
        %1713 = vmatpush1.xpose.msra.mxu0 0.0
        %1714 = vmatprep.subr.mxu0 0.0
        %1715 = vmatpush1.xpose.msra.mxu0 0.0
        %1716 = vmatprep.subr.mxu0 0.0
        %1717 = vmatpush1.xpose.msra.mxu0 0.0
        %1718 = vmatprep.subr.mxu0 0.0
        %1719 = vmatpush1.xpose.msra.mxu0 0.0
        %1720 = vmatprep.subr.mxu0 0.0
        %1721 = vmatpush1.xpose.msra.mxu0 0.0
        %1722 = vmatprep.subr.mxu0 0.0
        %1723 = vmatpush1.xpose.msra.mxu0 0.0
        %1724 = vmatprep.mubr.f32.mxu0 0.0
        %1725 = vmatmul.mubr.f32.gmra.mrb[0].mxu0 %v1652
        %v1726 = vpop.f32.mrb[0].mxu0
        %v1727 = vadd.f32 %v818, %v1726
        %v1728 = vpop.f32.mrb[0].mxu0
        %1729 = vmatprep.mubr.f32.mxu0 0.0
        %1730 = vmatmul.mubr.f32.gmra.mrb[0].mxu0 %v1654
        %v1731 = vpop.f32.mrb[0].mxu0
        %v1732 = vadd.f32 %v819, %v1731
        %v1733 = vpop.f32.mrb[0].mxu0
        %1734 = vdwg.mxu0
        %v1735 = vsel %vm987, %v1727, -inf
        %1736 = vmax.xlane.f32.xlu0 %v1735
        %v1737 = vpop.xlane.xlu0 %1736
        %v1738 = vsel %vm987, %v1732, -inf
        %1739 = vmax.xlane.f32.xlu0 %v1738
        %v1740 = vpop.xlane.xlu0 %1739
        %v1741 = vsub.f32 %v1727, %v1737
        %v1742 = vsub.f32 %v1732, %v1740
        %v1743 = vmul.f32 %v1741, 1.442695
        %v1744 = vpow.pop %v1743
        %v1745 = vmul.f32 %v1742, 1.442695
        %v1746 = vpow.pop %v1745
        %v1747 = vsel %vm987, %v1744, 0.0
        %1748 = vadd.xlane.f32.xlu0 %v1747
        %v1749 = vpop.xlane.xlu0 %1748
        %v1750 = vsel %vm987, %v1746, 0.0
        %1751 = vadd.xlane.f32.xlu0 %v1750
        %v1752 = vpop.xlane.xlu0 %1751
        %v1753 = vrcp.pop %v1749
        %v1754 = vrcp.pop %v1752
        %v1755 = vmul.f32 %v1744, %v1753
        %v1756 = vmul.f32 %v1746, %v1754
        %1757 = vrot.lane.b32.xlu0 %v883, 40
        %v1758 = vpop.permute.xlu0 %1757
        %1759 = vrot.lane.b32.xlu0 %v886, 40
        %v1760 = vpop.permute.xlu0 %1759
        %v1764 = vsel %vm987, %v1755, 0
        %v1767 = vsel %vm987, %v1756, 0
        %1769 = vmatprep.subr.mxu0 0.0
        %1770 = vmatpush1.msra.mxu0 %v1758
        %1771 = vmatprep.subr.mxu0 0.0
        %1772 = vmatpush1.msra.mxu0 %v1760
        %1773 = vmatprep.subr.mxu0 0.0
        %1774 = vmatpush1.msra.mxu0 0.0
        %1775 = vmatprep.subr.mxu0 0.0
        %1776 = vmatpush1.msra.mxu0 0.0
        %1777 = vmatprep.subr.mxu0 0.0
        %1778 = vmatpush1.msra.mxu0 0.0
        %1779 = vmatprep.subr.mxu0 0.0
        %1780 = vmatpush1.msra.mxu0 0.0
        %1781 = vmatprep.subr.mxu0 0.0
        %1782 = vmatpush1.msra.mxu0 0.0
        %1783 = vmatprep.subr.mxu0 0.0
        %1784 = vmatpush1.msra.mxu0 0.0
        %1785 = vmatprep.subr.mxu0 0.0
        %1786 = vmatpush1.msra.mxu0 0.0
        %1787 = vmatprep.subr.mxu0 0.0
        %1788 = vmatpush1.msra.mxu0 0.0
        %1789 = vmatprep.subr.mxu0 0.0
        %1790 = vmatpush1.msra.mxu0 0.0
        %1791 = vmatprep.subr.mxu0 0.0
        %1792 = vmatpush1.msra.mxu0 0.0
        %1793 = vmatprep.subr.mxu0 0.0
        %1794 = vmatpush1.msra.mxu0 0.0
        %1795 = vmatprep.subr.mxu0 0.0
        %1796 = vmatpush1.msra.mxu0 0.0
        %1797 = vmatprep.subr.mxu0 0.0
        %1798 = vmatpush1.msra.mxu0 0.0
        %1799 = vmatprep.subr.mxu0 0.0
        %1800 = vmatpush1.msra.mxu0 0.0
        %1801 = vmatprep.subr.mxu0 0.0
        %1802 = vmatpush1.msra.mxu0 0.0
        %1803 = vmatprep.subr.mxu0 0.0
        %1804 = vmatpush1.msra.mxu0 0.0
        %1805 = vmatprep.subr.mxu0 0.0
        %1806 = vmatpush1.msra.mxu0 0.0
        %1807 = vmatprep.subr.mxu0 0.0
        %1808 = vmatpush1.msra.mxu0 0.0
        %1809 = vmatprep.subr.mxu0 0.0
        %1810 = vmatpush1.msra.mxu0 0.0
        %1811 = vmatprep.subr.mxu0 0.0
        %1812 = vmatpush1.msra.mxu0 0.0
        %1813 = vmatprep.subr.mxu0 0.0
        %1814 = vmatpush1.msra.mxu0 0.0
        %1815 = vmatprep.subr.mxu0 0.0
        %1816 = vmatpush1.msra.mxu0 0.0
        %1817 = vmatprep.subr.mxu0 0.0
        %1818 = vmatpush1.msra.mxu0 0.0
        %1819 = vmatprep.subr.mxu0 0.0
        %1820 = vmatpush1.msra.mxu0 0.0
        %1821 = vmatprep.subr.mxu0 0.0
        %1822 = vmatpush1.msra.mxu0 0.0
        %1823 = vmatprep.subr.mxu0 0.0
        %1824 = vmatpush1.msra.mxu0 0.0
        %1825 = vmatprep.subr.mxu0 0.0
        %1826 = vmatpush1.msra.mxu0 0.0
        %1827 = vmatprep.subr.mxu0 0.0
        %1828 = vmatpush1.msra.mxu0 0.0
        %1829 = vmatprep.subr.mxu0 0.0
        %1830 = vmatpush1.msra.mxu0 0.0
        %1831 = vmatprep.subr.mxu0 0.0
        %1832 = vmatpush1.msra.mxu0 0.0
        %1833 = vmatprep.mubr.f32.mxu0 0.0
        %1834 = vmatmul.mubr.f32.gmra.mrb[0].mxu0 %v1764
        %v1835 = vpop.f32.mrb[0].mxu0
        %v1836 = vadd.f32 0.0, %v1835
        %v1837 = vpop.f32.mrb[0].mxu0
        %1838 = vmatprep.mubr.f32.mxu0 0.0
        %1839 = vmatmul.mubr.f32.gmra.mrb[0].mxu0 %v1767
        %v1840 = vpop.f32.mrb[0].mxu0
        %v1841 = vadd.f32 0.0, %v1840
        %v1842 = vpop.f32.mrb[0].mxu0
        %1843 = vdwg.mxu0
        %v1844 = vpack.c.bf16 %v1841, %v1836
        %v1846 = vsel %vm901, %v1844, 0
        %v1849 = vsel %vm1302, %v894, 0
        %1851 = vmatprep.subr.bf16.mxu0 0
        %1852 = vmatpush1.bf16.msra.mxu0 %v1849
        %1853 = vmatprep.subr.bf16.mxu0 0
        %1854 = vmatpush1.bf16.msra.mxu0 0
        %1855 = vmatprep.subr.bf16.mxu0 0
        %1856 = vmatpush1.bf16.msra.mxu0 0
        %1857 = vmatprep.subr.bf16.mxu0 0
        %1858 = vmatpush1.bf16.msra.mxu0 0
        %1859 = vmatprep.subr.bf16.mxu0 0
        %1860 = vmatpush1.bf16.msra.mxu0 0
        %1861 = vmatprep.subr.bf16.mxu0 0
        %1862 = vmatpush1.bf16.msra.mxu0 0
        %1863 = vmatprep.subr.bf16.mxu0 0
        %1864 = vmatpush1.bf16.msra.mxu0 0
        %1865 = vmatprep.subr.bf16.mxu0 0
        %1866 = vmatpush1.bf16.msra.mxu0 0
        %1867 = vmatprep.subr.bf16.mxu0 0
        %1868 = vmatpush1.bf16.msra.mxu0 0
        %1869 = vmatprep.subr.bf16.mxu0 0
        %1870 = vmatpush1.bf16.msra.mxu0 0
        %1871 = vmatprep.subr.bf16.mxu0 0
        %1872 = vmatpush1.bf16.msra.mxu0 0
        %1873 = vmatprep.subr.bf16.mxu0 0
        %1874 = vmatpush1.bf16.msra.mxu0 0
        %1875 = vmatprep.subr.bf16.mxu0 0
        %1876 = vmatpush1.bf16.msra.mxu0 0
        %1877 = vmatprep.subr.bf16.mxu0 0
        %1878 = vmatpush1.bf16.msra.mxu0 0
        %1879 = vmatprep.subr.bf16.mxu0 0
        %1880 = vmatpush1.bf16.msra.mxu0 0
        %1881 = vmatprep.subr.bf16.mxu0 0
        %1882 = vmatpush1.bf16.msra.mxu0 0
        %1883 = vmatprep.mubr.bf16.mxu0 0
        %1884 = vmatmul.mubr.bf16.gmra.mrb[0].mxu0 %v1846
        %v1885 = vpop.f32.mrb[0].mxu0
        %v1886 = vadd.f32 0.0, %v1885
        %v1887 = vpop.f32.mrb[0].mxu0
        %v1888 = vpop.f32.mrb[0].mxu0
        %v1889 = vadd.f32 0.0, %v1888
        %v1890 = vpop.f32.mrb[0].mxu0
        %1891 = vdwg.mxu0
        %v1892 = vadd.f32 %v1642, %v1886
        %v1893 = vadd.f32 %v1643, %v1889
        %v1894 = vld [vmem:[%s718] sm:$0x1]
        %v1896 = vlaneseq
        %v1897 = vshrl.u32 %v1896, 7
        %v1898 = vsub.s32 0, %v1897
        %v1899 = vrot.slane %v1894, %v1898
        %v1901 = vadd.f32 %v1892, %v1899
        %v1902 = vadd.f32 %v1893, %v1899
        %v1903 = vadd.f32 %v1901, %v816
        %v1904 = vadd.f32 %v1902, %v817
        %v1905 = vld [vmem:[%s721] sm:$0x1]
        %v1906 = vld [vmem:[%s724] sm:$0x1]
        %v1907 = vsel %vm844, %v1903, 0.0
        %1908 = vadd.xlane.f32.xlu0 %v1907
        %v1909 = vpop.xlane.xlu0 %1908
        %v1910 = vsel %vm844, %v1904, 0.0
        %1911 = vadd.xlane.f32.xlu0 %v1910
        %v1912 = vpop.xlane.xlu0 %1911
        %v1913 = vrcp.pop 32.0
        %v1914 = vmul.f32 %v1909, %v1913
        %v1915 = vmul.f32 %v1912, %v1913
        %v1916 = vsub.f32 %v1903, %v1914
        %v1917 = vsub.f32 %v1904, %v1915
        %v1918 = vmul.f32 %v1916, %v1916
        %v1919 = vmul.f32 %v1917, %v1917
        %v1920 = vsel %vm844, %v1918, 0.0
        %1921 = vadd.xlane.f32.xlu0 %v1920
        %v1922 = vpop.xlane.xlu0 %1921
        %v1923 = vsel %vm844, %v1919, 0.0
        %1924 = vadd.xlane.f32.xlu0 %v1923
        %v1925 = vpop.xlane.xlu0 %1924
        %v1926 = vmul.f32 %v1922, %v1913
        %v1927 = vmul.f32 %v1925, %v1913
        %v1928 = vadd.f32 %v1926, 1e-07
        %v1929 = vadd.f32 %v1927, 1e-07
        %v1930 = vrsqrt.pop %v1928
        %v1931 = vrsqrt.pop %v1929
        %v1932 = vmul.f32 %v1916, %v1930
        %v1933 = vmul.f32 %v1917, %v1931
        %v1935 = vlaneseq
        %v1936 = vshrl.u32 %v1935, 7
        %v1937 = vsub.s32 0, %v1936
        %v1938 = vrot.slane %v1905, %v1937
        %v1940 = vmul.f32 %v1932, %v1938
        %v1941 = vmul.f32 %v1933, %v1938
        %v1943 = vlaneseq
        %v1944 = vshrl.u32 %v1943, 7
        %v1945 = vsub.s32 0, %v1944
        %v1946 = vrot.slane %v1906, %v1945
        %v1948 = vadd.f32 %v1940, %v1946
        %v1949 = vadd.f32 %v1941, %v1946
        %v1950 = vpack.c.bf16 %v1949, %v1948
        %v1951 = vld [vmem:[%s729] sm:$0xf]
        %v1952 = vld [vmem:[%s729 + $0x4] sm:$0xf]
        %v1953 = vld [vmem:[%s729 + $0x8] sm:$0xf]
        %v1954 = vld [vmem:[%s729 + $0xc] sm:$0xf]
        %v1955 = vld [vmem:[%s732] sm:$0x1]
        %v1957 = vlaneseq
        %v1958 = vshrl.u32 %v1957, 7
        %v1959 = vsub.s32 0, %v1958
        %v1960 = vrot.slane %v1955, %v1959
        %v1966 = vunpack.c.l.b16 %v1951
        %v1967 = vunpack.c.l.b16 %v1952
        %v1968 = vunpack.c.l.b16 %v1953
        %v1969 = vunpack.c.l.b16 %v1954
        %v1970 = vpack.c.b16 %v1967, %v1966
        %v1971 = vpack.c.b16 %v1969, %v1968
        %v1975 = vsel %vm844, %v1950, 0
        %1977 = vmatprep.subr.bf16.mxu0 0
        %1978 = vmatpush1.bf16.msra.mxu0 %v1970
        %1979 = vmatprep.subr.bf16.mxu0 0
        %1980 = vmatpush1.bf16.msra.mxu0 %v1971
        %1981 = vmatprep.subr.bf16.mxu0 0
        %1982 = vmatpush1.bf16.msra.mxu0 0
        %1983 = vmatprep.subr.bf16.mxu0 0
        %1984 = vmatpush1.bf16.msra.mxu0 0
        %1985 = vmatprep.subr.bf16.mxu0 0
        %1986 = vmatpush1.bf16.msra.mxu0 0
        %1987 = vmatprep.subr.bf16.mxu0 0
        %1988 = vmatpush1.bf16.msra.mxu0 0
        %1989 = vmatprep.subr.bf16.mxu0 0
        %1990 = vmatpush1.bf16.msra.mxu0 0
        %1991 = vmatprep.subr.bf16.mxu0 0
        %1992 = vmatpush1.bf16.msra.mxu0 0
        %1993 = vmatprep.subr.bf16.mxu0 0
        %1994 = vmatpush1.bf16.msra.mxu0 0
        %1995 = vmatprep.subr.bf16.mxu0 0
        %1996 = vmatpush1.bf16.msra.mxu0 0
        %1997 = vmatprep.subr.bf16.mxu0 0
        %1998 = vmatpush1.bf16.msra.mxu0 0
        %1999 = vmatprep.subr.bf16.mxu0 0
        %2000 = vmatpush1.bf16.msra.mxu0 0
        %2001 = vmatprep.subr.bf16.mxu0 0
        %2002 = vmatpush1.bf16.msra.mxu0 0
        %2003 = vmatprep.subr.bf16.mxu0 0
        %2004 = vmatpush1.bf16.msra.mxu0 0
        %2005 = vmatprep.subr.bf16.mxu0 0
        %2006 = vmatpush1.bf16.msra.mxu0 0
        %2007 = vmatprep.subr.bf16.mxu0 0
        %2008 = vmatpush1.bf16.msra.mxu0 0
        %2009 = vmatprep.mubr.bf16.mxu0 0
        %2010 = vmatmul.mubr.bf16.gmra.mrb[0].mxu0 %v1975
        %v2011 = vpop.f32.mrb[0].mxu0
        %v2012 = vadd.f32 %v1960, %v2011
        %v2013 = vpop.f32.mrb[0].mxu0
        %v2014 = vpop.f32.mrb[0].mxu0
        %v2015 = vadd.f32 %v1960, %v2014
        %v2016 = vpop.f32.mrb[0].mxu0
        %2017 = vdwg.mxu0
        %v2018 = vmul.f32 %v2012, 0.5
        %v2019 = vmul.f32 %v2015, 0.5
        %v2020 = vmul.f32 %v2012, 0.044715
        %v2021 = vmul.f32 %v2015, 0.044715
        %v2022 = vmul.f32 %v2020, %v2012
        %v2023 = vmul.f32 %v2021, %v2015
        %v2024 = vmul.f32 %v2022, %v2012
        %v2025 = vmul.f32 %v2023, %v2015
        %v2026 = vadd.f32 %v2012, %v2024
        %v2027 = vadd.f32 %v2015, %v2025
        %v2028 = vmul.f32 %v2026, 0.7978846
        %v2029 = vmul.f32 %v2027, 0.7978846
        %v2030 = vtanh.pop %v2028
        %v2031 = vtanh.pop %v2029
        %v2032 = vadd.f32 %v2030, 1.0
        %v2033 = vadd.f32 %v2031, 1.0
        %v2034 = vmul.f32 %v2018, %v2032
        %v2035 = vmul.f32 %v2019, %v2033
        %v2036 = vpack.c.bf16 %v2035, %v2034
        %v2037 = vld [vmem:[%s737] sm:$0xf]
        %v2038 = vld [vmem:[%s737 + $0x4] sm:$0xf]
        %v2039 = vld [vmem:[%s737 + $0x8] sm:$0xf]
        %v2040 = vld [vmem:[%s737 + $0xc] sm:$0xf]
        %v2041 = vld [vmem:[%s737 + $0x10] sm:$0xf]
        %v2042 = vld [vmem:[%s737 + $0x14] sm:$0xf]
        %v2043 = vld [vmem:[%s737 + $0x18] sm:$0xf]
        %v2044 = vld [vmem:[%s737 + $0x1c] sm:$0xf]
        %v2045 = vld [vmem:[%s740] sm:$0x1]
        %v2047 = vlaneseq
        %v2048 = vshrl.u32 %v2047, 7
        %v2049 = vsub.s32 0, %v2048
        %v2050 = vrot.slane %v2045, %v2049
        %v2060 = vunpack.c.l.b16 %v2037
        %v2061 = vunpack.c.l.b16 %v2038
        %v2062 = vunpack.c.l.b16 %v2039
        %v2063 = vunpack.c.l.b16 %v2040
        %v2064 = vunpack.c.l.b16 %v2041
        %v2065 = vunpack.c.l.b16 %v2042
        %v2066 = vunpack.c.l.b16 %v2043
        %v2067 = vunpack.c.l.b16 %v2044
        %v2068 = vpack.c.b16 %v2061, %v2060
        %v2069 = vpack.c.b16 %v2063, %v2062
        %v2070 = vpack.c.b16 %v2065, %v2064
        %v2071 = vpack.c.b16 %v2067, %v2066
        %vm2076 = vcmask 523264
        %v2078 = vsel %vm2076, %v2036, 0
        %2080 = vmatprep.subr.bf16.mxu0 0
        %2081 = vmatpush1.bf16.msra.mxu0 %v2068
        %2082 = vmatprep.subr.bf16.mxu0 0
        %2083 = vmatpush1.bf16.msra.mxu0 %v2069
        %2084 = vmatprep.subr.bf16.mxu0 0
        %2085 = vmatpush1.bf16.msra.mxu0 %v2070
        %2086 = vmatprep.subr.bf16.mxu0 0
        %2087 = vmatpush1.bf16.msra.mxu0 %v2071
        %2088 = vmatprep.subr.bf16.mxu0 0
        %2089 = vmatpush1.bf16.msra.mxu0 0
        %2090 = vmatprep.subr.bf16.mxu0 0
        %2091 = vmatpush1.bf16.msra.mxu0 0
        %2092 = vmatprep.subr.bf16.mxu0 0
        %2093 = vmatpush1.bf16.msra.mxu0 0
        %2094 = vmatprep.subr.bf16.mxu0 0
        %2095 = vmatpush1.bf16.msra.mxu0 0
        %2096 = vmatprep.subr.bf16.mxu0 0
        %2097 = vmatpush1.bf16.msra.mxu0 0
        %2098 = vmatprep.subr.bf16.mxu0 0
        %2099 = vmatpush1.bf16.msra.mxu0 0
        %2100 = vmatprep.subr.bf16.mxu0 0
        %2101 = vmatpush1.bf16.msra.mxu0 0
        %2102 = vmatprep.subr.bf16.mxu0 0
        %2103 = vmatpush1.bf16.msra.mxu0 0
        %2104 = vmatprep.subr.bf16.mxu0 0
        %2105 = vmatpush1.bf16.msra.mxu0 0
        %2106 = vmatprep.subr.bf16.mxu0 0
        %2107 = vmatpush1.bf16.msra.mxu0 0
        %2108 = vmatprep.subr.bf16.mxu0 0
        %2109 = vmatpush1.bf16.msra.mxu0 0
        %2110 = vmatprep.subr.bf16.mxu0 0
        %2111 = vmatpush1.bf16.msra.mxu0 0
        %2112 = vmatprep.mubr.bf16.mxu0 0
        %2113 = vmatmul.mubr.bf16.gmra.mrb[0].mxu0 %v2078
        %v2114 = vpop.f32.mrb[0].mxu0
        %v2115 = vadd.f32 %v2050, %v2114
        %v2116 = vpop.f32.mrb[0].mxu0
        %v2117 = vpop.f32.mrb[0].mxu0
        %v2118 = vadd.f32 %v2050, %v2117
        %v2119 = vpop.f32.mrb[0].mxu0
        %2120 = vdwg.mxu0
        %v2121 = vadd.f32 %v2115, %v1948
        %v2122 = vadd.f32 %v2118, %v1949
        %v2123 = vld [vmem:[%s743] sm:$0x1]
        %v2124 = vld [vmem:[%s746] sm:$0x1]
        %v2125 = vsel %vm844, %v2121, 0.0
        %2126 = vadd.xlane.f32.xlu0 %v2125
        %v2127 = vpop.xlane.xlu0 %2126
        %v2128 = vsel %vm844, %v2122, 0.0
        %2129 = vadd.xlane.f32.xlu0 %v2128
        %v2130 = vpop.xlane.xlu0 %2129
        %v2131 = vmul.f32 %v2127, %v1913
        %v2132 = vmul.f32 %v2130, %v1913
        %v2133 = vsub.f32 %v2121, %v2131
        %v2134 = vsub.f32 %v2122, %v2132
        %v2135 = vmul.f32 %v2133, %v2133
        %v2136 = vmul.f32 %v2134, %v2134
        %v2137 = vsel %vm844, %v2135, 0.0
        %2138 = vadd.xlane.f32.xlu0 %v2137
        %v2139 = vpop.xlane.xlu0 %2138
        %v2140 = vsel %vm844, %v2136, 0.0
        %2141 = vadd.xlane.f32.xlu0 %v2140
        %v2142 = vpop.xlane.xlu0 %2141
        %v2143 = vmul.f32 %v2139, %v1913
        %v2144 = vmul.f32 %v2142, %v1913
        %v2145 = vadd.f32 %v2143, 1e-07
        %v2146 = vadd.f32 %v2144, 1e-07
        %v2147 = vrsqrt.pop %v2145
        %v2148 = vrsqrt.pop %v2146
        %v2149 = vmul.f32 %v2133, %v2147
        %v2150 = vmul.f32 %v2134, %v2148
        %v2152 = vlaneseq
        %v2153 = vshrl.u32 %v2152, 7
        %v2154 = vsub.s32 0, %v2153
        %v2155 = vrot.slane %v2123, %v2154
        %v2157 = vmul.f32 %v2149, %v2155
        %v2158 = vmul.f32 %v2150, %v2155
        %v2160 = vlaneseq
        %v2161 = vshrl.u32 %v2160, 7
        %v2162 = vsub.s32 0, %v2161
        %v2163 = vrot.slane %v2124, %v2162
        %v2165 = vadd.f32 %v2157, %v2163
        %v2166 = vadd.f32 %v2158, %v2163
        %2167 = vst.msk [vmem:[#allocation2] sm:$0xff] %vm844, %v2165
        %2168 = vst.msk [vmem:[#allocation2 + $0x8] sm:$0xff] %vm844, %v2166
        %p2169 = scmp.eq.s32.totalorder %s31, 1
        // Predicated region
        $region105: #{tpu_custom_call.1} parent=87 // pred_check
          %p2170 = pneg %p2169
        $region106: #{tpu_custom_call.1} parent=87 // pred_check_branch
          %2172 = sbr.rel (%p2170) target = $region108
        $region107: #{tpu_custom_call.1} parent=87 // pred_region
          %vm2173 = vcmask 253952
          %2174 = vst.msk [vmem:[#allocation9] sm:$0x1] %vm2173, %v2165
          %2175 = vst.msk [vmem:[#allocation9 + $0x1] sm:$0x1] %vm2173, %v2166
        $region108: #{tpu_custom_call.1} parent=87 // pred_fallthru
          _
        // Predicated region
        $region109: #{tpu_custom_call.1} parent=87 // pred_check
          %p2176 = pneg %p461
        $region110: #{tpu_custom_call.1} parent=87 // pred_check_branch
          %2178 = sbr.rel (%p2176) target = $region112
        $region111: #{tpu_custom_call.1} parent=87 // pred_region
          %s2180 = ssub.s32 32, 32
          %2181 = vsyncadd [#allocation5], %s2180
          %s2183 = sshll.u32 [#allocation9], 4
          %s2184 = int_to_ptr.vmem [resolvable:$true] %s2183
          %2186 = dma.vmem_to_hbm [thread:$0]  %s2184, 32, %s17, [#allocation5]
        $region112: #{tpu_custom_call.1} parent=87 // pred_fallthru
          _
        // Predicated region
        $region113: #{tpu_custom_call.1} parent=87 // pred_check
          %p2187 = pneg %p461
        $region114: #{tpu_custom_call.1} parent=87 // pred_check_branch
          %2189 = sbr.rel (%p2187) target = $region116
        $region115: #{tpu_custom_call.1} parent=87 // pred_region
          %2190 = dma.done [#allocation5], 32
        $region116: #{tpu_custom_call.1} parent=87 // pred_fallthru
          _
      $region88: #{tpu_custom_call.1} parent=5 // pred_fallthru
        _
      %p2191 = scmp.le.s32.totalorder 2, %s26
      // Predicated region
      $region117: #{tpu_custom_call.1} parent=5 // pred_check
        %p2192 = pneg %p2191
      $region118: #{tpu_custom_call.1} parent=5 // pred_check_branch
        %2194 = sbr.rel (%p2192) target = $region120
      $region119: #{tpu_custom_call.1} parent=5 // pred_region
        %s2195 = ssub.s32 %s26, 2
      $region120: #{tpu_custom_call.1} parent=5 // pred_fallthru
        _
    $region6: #{tpu_custom_call.1} parent=1 // loop_footer
      %s30 = sadd.s32 1, %s26
    $region7: #{tpu_custom_call.1} parent=1 // loop_footer_branch
      %25 = sbr.rel target = $region3
    $region8: #{tpu_custom_call.1} parent=1 // loop_exit
      _
    %2196 = vsyncpa [#allocation4], 1
    %s2197 = scalar_lea.sflag [#allocation4], 1
    %2198 = vsyncpa %s2197, 1
    %2199 = vsyncpa [#allocation7], 1
    %2200 = vsyncpa [#allocation5], 1
    %s2201 = scalar_lea.sflag [#allocation5], 1
    %2202 = vsyncpa %s2201, 1

</llo_original>
